<compile_context>
chip_gen: v7x
topology: tpu7x:2x2x1
jax: 0.10.0
libtpu: 0.0.40
codegen_flags: <defaults>
</compile_context>

<pallas_src>
import functools

import jax
import jax.numpy as jnp
from jax.experimental import pallas as pl
from jax.experimental.pallas import tpu as pltpu


def _round_up(x, m):
    return (x + m - 1) // m * m


# --------------------------------------------------------------------------
# Unified message-passing kernel (used for both SAGE and Cheb layers)
#
#   out = PReLU( maybe_l2norm( root @ Wa + (acc*rs + g*root) @ Wb + b ) )
#   with  acc = A @ msg   accumulated over the reduction grid axis.
# --------------------------------------------------------------------------
def _mp_kernel(a_ref, msg_ref, root_ref, rs_ref, g_ref, wa_ref, wb_ref,
               b_ref, alpha_ref, o_ref, acc_ref, *, normalize):
    k = pl.program_id(1)
    tk = a_ref.shape[1]

    @pl.when(k == 0)
    def _():
        acc_ref[...] = jnp.zeros_like(acc_ref)

    # One reduction step: (tm, tk) int8 edge-counts x (tk, mpad) bf16 messages.
    # The int8 -> bf16 cast is exact (small integer counts) and is VPU filler
    # on a memory-bound kernel.  Messages are VMEM-resident; slice rows here.
    off = pl.multiple_of(k * tk, tk)
    a_blk = a_ref[...].astype(jnp.bfloat16)
    acc_ref[...] += jnp.dot(a_blk, msg_ref[pl.ds(off, tk), :],
                            preferred_element_type=jnp.float32)

    @pl.when(k == pl.num_programs(1) - 1)
    def _():
        root = root_ref[...]                               # bf16 (tm, rpad)
        # row scale + diagonal (self-loop) correction, all in f32
        agg = acc_ref[...] * rs_ref[...] + g_ref[...] * root.astype(jnp.float32)
        # two small bf16 MXU dots accumulated in f32 (no lane concat)
        out = (jnp.dot(root, wa_ref[...], preferred_element_type=jnp.float32)
               + jnp.dot(agg.astype(jnp.bfloat16), wb_ref[...],
                         preferred_element_type=jnp.float32)
               + b_ref[...])
        if normalize:
            # F.normalize(p=2, dim=-1) via EUP rsqrt (padded lanes are zero)
            ss = jnp.sum(out * out, axis=-1, keepdims=True)
            out = out * jax.lax.rsqrt(jnp.maximum(ss, 1e-24))
        out = jnp.where(out >= 0, out, alpha_ref[...] * out)   # shared PReLU
        o_ref[...] = out.astype(o_ref.dtype)


# --------------------------------------------------------------------------
# Tiled message-passing layer wrapper
# --------------------------------------------------------------------------
def _mp_layer(adj_i8, msg, root, rs, g, wa, wb, b, alpha,
              out_dtype, tm, tk, normalize):
    n_pad = adj_i8.shape[0]
    mpad = msg.shape[1]           # message feature width (padded to 128)
    rpad = root.shape[1]          # root feature width   (padded to 128)
    hpad = wa.shape[1]            # output width         (padded to 128)
    grid = (n_pad // tm, n_pad // tk)

    kernel = functools.partial(_mp_kernel, normalize=normalize)

    flops = 2 * n_pad * n_pad * mpad + 2 * n_pad * (rpad + mpad) * hpad
    bytes_accessed = (n_pad * n_pad                      # int8 adjacency
                      + 2 * n_pad * (mpad + rpad)        # bf16 features
                      + n_pad * hpad * jnp.dtype(out_dtype).itemsize)

    return pl.pallas_call(
        kernel,
        out_shape=jax.ShapeDtypeStruct((n_pad, hpad), out_dtype),
        grid_spec=pltpu.PrefetchScalarGridSpec(
            num_scalar_prefetch=0,
            grid=grid,
            in_specs=[
                # adjacency tile: the dominant HBM stream (int8)
                pl.BlockSpec((tm, tk), lambda i, k: (i, k)),
                # message features: fully VMEM-resident (DMA'd once)
                pl.BlockSpec((n_pad, mpad), lambda i, k: (0, 0)),
                # root features: fetched once per row tile
                pl.BlockSpec((tm, rpad), lambda i, k: (i, 0)),
                # per-row scale and diagonal-correction scalars
                pl.BlockSpec((tm, 1), lambda i, k: (i, 0)),
                pl.BlockSpec((tm, 1), lambda i, k: (i, 0)),
                # weights / bias / PReLU alpha: resident
                pl.BlockSpec(wa.shape, lambda i, k: (0, 0)),
                pl.BlockSpec(wb.shape, lambda i, k: (0, 0)),
                pl.BlockSpec(b.shape, lambda i, k: (0, 0)),
                pl.BlockSpec(alpha.shape, lambda i, k: (0, 0)),
            ],
            out_specs=pl.BlockSpec((tm, hpad), lambda i, k: (i, 0)),
            scratch_shapes=[pltpu.VMEM((tm, mpad), jnp.float32)],
        ),
        compiler_params=pltpu.CompilerParams(
            dimension_semantics=("parallel", "arbitrary"),
            vmem_limit_bytes=32 * 1024 * 1024,
        ),
        cost_estimate=pl.CostEstimate(
            flops=flops, transcendentals=n_pad if normalize else 0,
            bytes_accessed=bytes_accessed),
    )(adj_i8, msg, root, rs, g, wa, wb, b, alpha)


# --------------------------------------------------------------------------
# Tile selection: pad N only to 128; tm/tk are 128-multiples dividing n_pad.
# --------------------------------------------------------------------------
def _choose_tiles(n_pad):
    divisors = [d for d in range(128, n_pad + 1, 128) if n_pad % d == 0]

    def pick(cap):
        opts = [d for d in divisors if d <= cap]
        return max(opts) if opts else 128

    # keep >= 2 row tiles when possible so both v7x TensorCores get work;
    # 1024/512 caps keep the footprint a few MiB even on v7x's 64 MiB VMEM.
    tm = pick(min(1024, max(128, n_pad // 2)))
    tk = pick(512)
    return tm, tk


# --------------------------------------------------------------------------
# Graph preprocessing (once per static graph; hoisted out of the forward).
# Dense operators are PyG-faithful (flow='source_to_target').
# --------------------------------------------------------------------------
def prepare_graph(edge_index, num_nodes):
    # TODO(synk): for large sparse graphs keep edges in CSR + scalar-prefetch
    # gather instead of densifying to (N,N).
    n_pad = _round_up(num_nodes, 128)
    src, dst = edge_index[0], edge_index[1]
    f32 = jnp.float32

    # A[i, j] = number of edges j -> i (messages aggregated at the target)
    a = jnp.zeros((num_nodes, num_nodes), f32).at[dst, src].add(1.0)

    # SAGE mean aggregation: row scale 1 / in-degree (edge count)
    in_deg = jnp.sum(a, axis=1, keepdims=True)
    rs1 = 1.0 / jnp.maximum(in_deg, 1.0)

    # ChebConv 'sym' (lambda_max = 2): PyG removes self-loops, scatters the
    # degree on src, and the scaled Laplacian is -D^-1/2 A D^-1/2, zero diag.
    self_loops = jnp.diagonal(a)[:, None]
    not_loop = (src != dst).astype(f32)
    deg = jnp.zeros((num_nodes,), f32).at[src].add(not_loop)[:, None]
    dinv = jnp.where(deg > 0, jax.lax.rsqrt(jnp.maximum(deg, 1.0)), 0.0)
    rs2 = -dinv                                   # row scale
    g2 = self_loops * dinv * dinv                 # removes A's diagonal term

    def pad_rows(v):
        return jnp.pad(v, ((0, n_pad - num_nodes), (0, 0)))

    # edge counts assumed < 128 per (i, j) pair for the int8 adjacency
    adj = jnp.pad(a, ((0, n_pad - num_nodes), (0, n_pad - num_nodes)))
    return dict(
        adj=adj.astype(jnp.int8),
        rs1=pad_rows(rs1), rs2=pad_rows(rs2), g2=pad_rows(g2),
        dinv=pad_rows(dinv), zero=jnp.zeros((n_pad, 1), f32),
    )


# --------------------------------------------------------------------------
# Full Encoder forward (graph operators are precomputed via prepare_graph)
# --------------------------------------------------------------------------
@jax.jit
def encoder_forward(x, graph, params):
    n, cin = x.shape
    n_pad = graph["adj"].shape[0]
    hidden = params["w0"].shape[1]
    cpad = _round_up(cin, 128)
    hpad = _round_up(hidden, 128)
    tm, tk = _choose_tiles(n_pad)
    f32, bf16 = jnp.float32, jnp.bfloat16

    def pad2(w, r, c):
        return jnp.pad(w, ((0, r - w.shape[0]), (0, c - w.shape[1])))

    wl = pad2(params["wl"], cpad, hpad).astype(bf16)
    wr = pad2(params["wr"], cpad, hpad).astype(bf16)
    w0 = pad2(params["w0"], hpad, hpad).astype(bf16)
    w1 = pad2(params["w1"], hpad, hpad).astype(bf16)
    bl = pad2(params["bl"], 1, hpad)
    bc = pad2(params["bcheb"], 1, hpad)
    alpha = pad2(params["alpha"], 1, hpad)

    x_bf16 = pad2(x.astype(f32), n_pad, cpad).astype(bf16)

    # ---- layer 1: SAGEConv(mean, normalize=True) + PReLU  (bf16 output) ----
    h = _mp_layer(graph["adj"], x_bf16, x_bf16,
                  graph["rs1"], graph["zero"],
                  wr, wl, bl, alpha, bf16, tm, tk, normalize=True)

    # ---- layer 2: ChebConv(K=2, 'sym') + PReLU  (f32 output) ---------------
    msg2 = (h.astype(f32) * graph["dinv"]).astype(bf16)   # fold column D^-1/2
    out = _mp_layer(graph["adj"], msg2, h,
                    graph["rs2"], graph["g2"],
                    w0, w1, bc, alpha, f32, tm, tk, normalize=False)
    return out[:n, :hidden]


# --------------------------------------------------------------------------
# Parameters (shapes follow the PyTorch module)
# --------------------------------------------------------------------------
def init_params(key, in_channels, hidden):
    ks = jax.random.split(key, 6)
    s_in = 1.0 / jnp.sqrt(in_channels)
    s_h = 1.0 / jnp.sqrt(hidden)
    return dict(
        # SAGEConv: lin_l (bias) on aggregated messages, lin_r (no bias) on root
        wl=jax.random.uniform(ks[0], (in_channels, hidden), jnp.float32, -s_in, s_in),
        bl=jax.random.uniform(ks[1], (1, hidden), jnp.float32, -s_in, s_in),
        wr=jax.random.uniform(ks[2], (in_channels, hidden), jnp.float32, -s_in, s_in),
        # ChebConv K=2: two bias-free Linears + shared bias
        w0=jax.random.uniform(ks[3], (hidden, hidden), jnp.float32, -s_h, s_h),
        w1=jax.random.uniform(ks[4], (hidden, hidden), jnp.float32, -s_h, s_h),
        bcheb=jax.random.uniform(ks[5], (1, hidden), jnp.float32, -s_h, s_h),
        # single PReLU(hidden) shared by both layers (as in the PyTorch spec)
        alpha=jnp.full((1, hidden), 0.25, jnp.float32),
    )


# --------------------------------------------------------------------------
# Pure-JAX references for correctness checks
# --------------------------------------------------------------------------
def _dense_ops(x, edge_index):
    n = x.shape[0]
    src, dst = edge_index[0], edge_index[1]
    f32 = jnp.float32
    a = jnp.zeros((n, n), f32).at[dst, src].add(1.0)
    a_mean = a / jnp.maximum(jnp.sum(a, axis=1, keepdims=True), 1.0)
    not_loop = (src != dst).astype(f32)
    deg = jnp.zeros((n,), f32).at[src].add(not_loop)
    dinv = jnp.where(deg > 0, jax.lax.rsqrt(jnp.maximum(deg, 1.0)), 0.0)
    w = -dinv[src] * dinv[dst] * not_loop
    l_hat = jnp.zeros((n, n), f32).at[dst, src].add(w)
    return a, a_mean, l_hat, dinv


def encoder_reference(x, edge_index, p):
    """Full-f32 reference (true module semantics)."""
    _, a_mean, l_hat, _ = _dense_ops(x, edge_index)
    h = a_mean @ x @ p["wl"] + p["bl"] + x @ p["wr"]
    h = h / jnp.maximum(jnp.sqrt(jnp.sum(h * h, -1, keepdims=True)), 1e-12)
    h = jnp.where(h >= 0, h, p["alpha"] * h)
    out = h @ p["w0"] + (l_hat @ h) @ p["w1"] + p["bcheb"]
    return jnp.where(out >= 0, out, p["alpha"] * out)


def encoder_reference_bf16(x, edge_index, p):
    """Reference emulating the kernel's factored math and bf16 casts."""
    f32, bf16 = jnp.float32, jnp.bfloat16
    a, _, _, dinv = _dense_ops(x, edge_index)
    rs1 = 1.0 / jnp.maximum(jnp.sum(a, 1, keepdims=True), 1.0)
    c = jnp.diagonal(a)[:, None]
    dinv = dinv[:, None]

    xb = x.astype(bf16)
    wl, wr = p["wl"].astype(bf16), p["wr"].astype(bf16)
    w0, w1 = p["w0"].astype(bf16), p["w1"].astype(bf16)

    agg = jnp.dot(a.astype(bf16), xb, preferred_element_type=f32) * rs1
    h = (jnp.dot(xb, wr, preferred_element_type=f32)
         + jnp.dot(agg.astype(bf16), wl, preferred_element_type=f32) + p["bl"])
    h = h * jax.lax.rsqrt(jnp.maximum(jnp.sum(h * h, -1, keepdims=True), 1e-24))
    h = jnp.where(h >= 0, h, p["alpha"] * h).astype(bf16)

    msg2 = (h.astype(f32) * dinv).astype(bf16)
    y = jnp.dot(a.astype(bf16), msg2, preferred_element_type=f32)
    tx1 = y * (-dinv) + (c * dinv * dinv) * h.astype(f32)
    out = (jnp.dot(h, w0, preferred_element_type=f32)
           + jnp.dot(tx1.astype(bf16), w1, preferred_element_type=f32)
           + p["bcheb"])
    return jnp.where(out >= 0, out, p["alpha"] * out)


if __name__ == "__main__":
    N, IN_CH, HIDDEN, E = 16, 8, 32, 48

    key = jax.random.PRNGKey(0)
    kx, ke1, ke2, kp = jax.random.split(key, 4)

    x = jax.random.normal(kx, (N, IN_CH), jnp.float32)
    src = jax.random.randint(ke1, (E,), 0, N, jnp.int32)
    dst = jax.random.randint(ke2, (E,), 0, N, jnp.int32)
    edge_index = jnp.stack([src, dst], axis=0)          # (2, E)

    params = init_params(kp, IN_CH, HIDDEN)

    graph = prepare_graph(edge_index, N)                # once per static graph
    out = jax.block_until_ready(encoder_forward(x, graph, params))
    assert out.shape == (N, HIDDEN)

    ref16 = jax.block_until_ready(encoder_reference_bf16(x, edge_index, params))
    ref32 = jax.block_until_ready(encoder_reference(x, edge_index, params))
    assert jnp.allclose(out, ref16, atol=5e-3, rtol=5e-3), \
        "mismatch vs bf16-emulating reference"
    assert jnp.allclose(out, ref32, atol=5e-2, rtol=5e-2), \
        "mismatch vs f32 reference"

    print("KERNEL_OK")
</pallas_src>

<mosaic_0001>
module attributes {stable_mosaic.version = 11 : i64} {
  func.func @_mp_kernel(%arg0: i32, %arg1: i32, %arg2: memref<128x128xi8, #tpu.memory_space<vmem>>, %arg3: memref<128x128xbf16, #tpu.memory_space<vmem>>, %arg4: memref<128x128xbf16, #tpu.memory_space<vmem>>, %arg5: memref<128x1xf32, #tpu.memory_space<vmem>>, %arg6: memref<128x1xf32, #tpu.memory_space<vmem>>, %arg7: memref<128x128xbf16, #tpu.memory_space<vmem>>, %arg8: memref<128x128xbf16, #tpu.memory_space<vmem>>, %arg9: memref<1x128xf32, #tpu.memory_space<vmem>>, %arg10: memref<1x128xf32, #tpu.memory_space<vmem>>, %arg11: memref<128x128xf32, #tpu.memory_space<vmem>>, %arg12: memref<128x128xf32, #tpu.memory_space<vmem>>) attributes {dimension_semantics = [#tpu.dimension_semantics<parallel>, #tpu.dimension_semantics<arbitrary>], iteration_bounds = array<i64: 1, 1>, scalar_prefetch = 0 : i64, scratch_operands = 1 : i64, tpu.core_type = #tpu.core_type<tc>, window_params = [{transform_indices = @transform_0, window_bounds = array<i64: 128, 128>}, {pipeline_mode = #tpu.pipeline_mode<synchronous>, transform_indices = @transform_1, window_bounds = array<i64: 128, 128>}, {transform_indices = @transform_2, window_bounds = array<i64: 128, 128>}, {transform_indices = @transform_3, window_bounds = array<i64: 128, 1>}, {transform_indices = @transform_4, window_bounds = array<i64: 128, 1>}, {pipeline_mode = #tpu.pipeline_mode<synchronous>, transform_indices = @transform_5, window_bounds = array<i64: 128, 128>}, {pipeline_mode = #tpu.pipeline_mode<synchronous>, transform_indices = @transform_6, window_bounds = array<i64: 128, 128>}, {pipeline_mode = #tpu.pipeline_mode<synchronous>, transform_indices = @transform_7, window_bounds = array<i64: 1, 128>}, {pipeline_mode = #tpu.pipeline_mode<synchronous>, transform_indices = @transform_8, window_bounds = array<i64: 1, 128>}, {transform_indices = @transform_9, window_bounds = array<i64: 128, 128>}]} {
    %c0_i32 = arith.constant 0 : i32
    %0 = arith.cmpi eq, %arg1, %c0_i32 : i32
    %1 = arith.extui %0 : i1 to i32
    %c0_i32_0 = arith.constant 0 : i32
    %2 = arith.cmpi ne, %1, %c0_i32_0 : i32
    scf.if %2 {
      %cst_9 = arith.constant 0.000000e+00 : f32
      %16 = vector.broadcast %cst_9 : f32 to vector<128x128xf32>
      %c0_10 = arith.constant 0 : index
      %c0_11 = arith.constant 0 : index
      %17 = vector.load %arg12[%c0_10, %c0_11] : memref<128x128xf32, #tpu.memory_space<vmem>>, vector<128x128xf32>
      tpu.vector_store %arg12[%c0_10, %c0_11], %16 {strides = array<i32>} : memref<128x128xf32, #tpu.memory_space<vmem>>, vector<128x128xf32>,
    } else {
    }
    %c128_i32 = arith.constant 128 : i32
    %3 = arith.muli %arg1, %c128_i32 : i32
    %4 = tpu.assume_multiple %3, 128 : i32
    %c0 = arith.constant 0 : index
    %c0_1 = arith.constant 0 : index
    %5 = vector.load %arg2[%c0, %c0_1] : memref<128x128xi8, #tpu.memory_space<vmem>>, vector<128x128xi8>
    %6 = arith.sitofp %5 : vector<128x128xi8> to vector<128x128xbf16>
    %c0_2 = arith.constant 0 : index
    %c0_3 = arith.constant 0 : index
    %7 = vector.load %arg12[%c0_2, %c0_3] : memref<128x128xf32, #tpu.memory_space<vmem>>, vector<128x128xf32>
    %8 = arith.index_cast %4 : i32 to index
    %c0_4 = arith.constant 0 : index
    %9 = vector.load %arg3[%8, %c0_4] : memref<128x128xbf16, #tpu.memory_space<vmem>>, vector<128x128xbf16>
    %cst = arith.constant dense<0.000000e+00> : vector<128x128xf32>
    %10 = tpu.matmul %6, %9, %cst {dimension_numbers = #tpu.dot_dimension_numbers<[1], [0], [0], [1], [0, 0, 1, 1], [], []>} : vector<128x128xbf16>, vector<128x128xbf16>, vector<128x128xf32> -> vector<128x128xf32>
    %11 = arith.addf %7, %10 : vector<128x128xf32>
    %c0_5 = arith.constant 0 : index
    %c0_6 = arith.constant 0 : index
    %12 = vector.load %arg12[%c0_5, %c0_6] : memref<128x128xf32, #tpu.memory_space<vmem>>, vector<128x128xf32>
    tpu.vector_store %arg12[%c0_5, %c0_6], %11 {strides = array<i32>} : memref<128x128xf32, #tpu.memory_space<vmem>>, vector<128x128xf32>,
    %c0_i32_7 = arith.constant 0 : i32
    %13 = arith.cmpi eq, %arg1, %c0_i32_7 : i32
    %14 = arith.extui %13 : i1 to i32
    %c0_i32_8 = arith.constant 0 : i32
    %15 = arith.cmpi ne, %14, %c0_i32_8 : i32
    scf.if %15 {
      %c0_9 = arith.constant 0 : index
      %c0_10 = arith.constant 0 : index
      %16 = vector.load %arg4[%c0_9, %c0_10] : memref<128x128xbf16, #tpu.memory_space<vmem>>, vector<128x128xbf16>
      %c0_11 = arith.constant 0 : index
      %c0_12 = arith.constant 0 : index
      %17 = vector.load %arg12[%c0_11, %c0_12] : memref<128x128xf32, #tpu.memory_space<vmem>>, vector<128x128xf32>
      %c0_13 = arith.constant 0 : index
      %c0_14 = arith.constant 0 : index
      %18 = vector.load %arg5[%c0_13, %c0_14] : memref<128x1xf32, #tpu.memory_space<vmem>>, vector<128x1xf32>
      %19 = vector.broadcast %18 : vector<128x1xf32> to vector<128x128xf32>
      %20 = arith.mulf %17, %19 : vector<128x128xf32>
      %c0_15 = arith.constant 0 : index
      %c0_16 = arith.constant 0 : index
      %21 = vector.load %arg6[%c0_15, %c0_16] : memref<128x1xf32, #tpu.memory_space<vmem>>, vector<128x1xf32>
      %22 = arith.extf %16 : vector<128x128xbf16> to vector<128x128xf32>
      %23 = vector.broadcast %21 : vector<128x1xf32> to vector<128x128xf32>
      %24 = arith.mulf %23, %22 : vector<128x128xf32>
      %25 = arith.addf %20, %24 : vector<128x128xf32>
      %c0_17 = arith.constant 0 : index
      %c0_18 = arith.constant 0 : index
      %26 = vector.load %arg7[%c0_17, %c0_18] : memref<128x128xbf16, #tpu.memory_space<vmem>>, vector<128x128xbf16>
      %cst_19 = arith.constant dense<0.000000e+00> : vector<128x128xf32>
      %27 = tpu.matmul %16, %26, %cst_19 {dimension_numbers = #tpu.dot_dimension_numbers<[1], [0], [0], [1], [0, 0, 1, 1], [], []>} : vector<128x128xbf16>, vector<128x128xbf16>, vector<128x128xf32> -> vector<128x128xf32>
      %28 = arith.truncf %25 : vector<128x128xf32> to vector<128x128xbf16>
      %c0_20 = arith.constant 0 : index
      %c0_21 = arith.constant 0 : index
      %29 = vector.load %arg8[%c0_20, %c0_21] : memref<128x128xbf16, #tpu.memory_space<vmem>>, vector<128x128xbf16>
      %cst_22 = arith.constant dense<0.000000e+00> : vector<128x128xf32>
      %30 = tpu.matmul %28, %29, %cst_22 {dimension_numbers = #tpu.dot_dimension_numbers<[1], [0], [0], [1], [0, 0, 1, 1], [], []>} : vector<128x128xbf16>, vector<128x128xbf16>, vector<128x128xf32> -> vector<128x128xf32>
      %31 = arith.addf %27, %30 : vector<128x128xf32>
      %c0_23 = arith.constant 0 : index
      %c0_24 = arith.constant 0 : index
      %32 = vector.load %arg9[%c0_23, %c0_24] : memref<1x128xf32, #tpu.memory_space<vmem>>, vector<1x128xf32>
      %33 = vector.broadcast %32 : vector<1x128xf32> to vector<128x128xf32>
      %34 = arith.addf %31, %33 : vector<128x128xf32>
      %cst_25 = arith.constant 0.000000e+00 : f32
      %35 = vector.broadcast %cst_25 : f32 to vector<128x128xf32>
      %36 = arith.cmpf oge, %34, %35 : vector<128x128xf32>
      %c0_26 = arith.constant 0 : index
      %c0_27 = arith.constant 0 : index
      %37 = vector.load %arg10[%c0_26, %c0_27] : memref<1x128xf32, #tpu.memory_space<vmem>>, vector<1x128xf32>
      %38 = vector.broadcast %37 : vector<1x128xf32> to vector<128x128xf32>
      %39 = arith.mulf %38, %34 : vector<128x128xf32>
      %40 = arith.select %36, %34, %39 : vector<128x128xi1>, vector<128x128xf32>
      %c0_28 = arith.constant 0 : index
      %c0_29 = arith.constant 0 : index
      %41 = vector.load %arg11[%c0_28, %c0_29] : memref<128x128xf32, #tpu.memory_space<vmem>>, vector<128x128xf32>
      tpu.vector_store %arg11[%c0_28, %c0_29], %40 {strides = array<i32>} : memref<128x128xf32, #tpu.memory_space<vmem>>, vector<128x128xf32>,
    } else {
    }
    return
  }
  func.func @transform_0(%arg0: i32, %arg1: i32) -> (i32, i32) {
    %c0_i32 = arith.constant 0 : i32
    return %arg0, %arg1 : i32, i32
  }
  func.func @transform_1(%arg0: i32, %arg1: i32) -> (i32, i32) {
    %c0_i32 = arith.constant 0 : i32
    %c0_i32_0 = arith.constant 0 : i32
    %c0_i32_1 = arith.constant 0 : i32
    return %c0_i32, %c0_i32_0 : i32, i32
  }
  func.func @transform_2(%arg0: i32, %arg1: i32) -> (i32, i32) {
    %c0_i32 = arith.constant 0 : i32
    %c0_i32_0 = arith.constant 0 : i32
    return %arg0, %c0_i32 : i32, i32
  }
  func.func @transform_3(%arg0: i32, %arg1: i32) -> (i32, i32) {
    %c0_i32 = arith.constant 0 : i32
    %c0_i32_0 = arith.constant 0 : i32
    return %arg0, %c0_i32 : i32, i32
  }
  func.func @transform_4(%arg0: i32, %arg1: i32) -> (i32, i32) {
    %c0_i32 = arith.constant 0 : i32
    %c0_i32_0 = arith.constant 0 : i32
    return %arg0, %c0_i32 : i32, i32
  }
  func.func @transform_5(%arg0: i32, %arg1: i32) -> (i32, i32) {
    %c0_i32 = arith.constant 0 : i32
    %c0_i32_0 = arith.constant 0 : i32
    %c0_i32_1 = arith.constant 0 : i32
    return %c0_i32, %c0_i32_0 : i32, i32
  }
  func.func @transform_6(%arg0: i32, %arg1: i32) -> (i32, i32) {
    %c0_i32 = arith.constant 0 : i32
    %c0_i32_0 = arith.constant 0 : i32
    %c0_i32_1 = arith.constant 0 : i32
    return %c0_i32, %c0_i32_0 : i32, i32
  }
  func.func @transform_7(%arg0: i32, %arg1: i32) -> (i32, i32) {
    %c0_i32 = arith.constant 0 : i32
    %c0_i32_0 = arith.constant 0 : i32
    %c0_i32_1 = arith.constant 0 : i32
    return %c0_i32, %c0_i32_0 : i32, i32
  }
  func.func @transform_8(%arg0: i32, %arg1: i32) -> (i32, i32) {
    %c0_i32 = arith.constant 0 : i32
    %c0_i32_0 = arith.constant 0 : i32
    %c0_i32_1 = arith.constant 0 : i32
    return %c0_i32, %c0_i32_0 : i32, i32
  }
  func.func @transform_9(%arg0: i32, %arg1: i32) -> (i32, i32) {
    %c0_i32 = arith.constant 0 : i32
    %c0_i32_0 = arith.constant 0 : i32
    return %arg0, %c0_i32 : i32, i32
  }
}

module attributes {stable_mosaic.version = 11 : i64} {
  func.func @_mp_kernel(%arg0: i32, %arg1: i32, %arg2: memref<128x128xi8, #tpu.memory_space<vmem>>, %arg3: memref<128x128xbf16, #tpu.memory_space<vmem>>, %arg4: memref<128x128xbf16, #tpu.memory_space<vmem>>, %arg5: memref<128x1xf32, #tpu.memory_space<vmem>>, %arg6: memref<128x1xf32, #tpu.memory_space<vmem>>, %arg7: memref<128x128xbf16, #tpu.memory_space<vmem>>, %arg8: memref<128x128xbf16, #tpu.memory_space<vmem>>, %arg9: memref<1x128xf32, #tpu.memory_space<vmem>>, %arg10: memref<1x128xf32, #tpu.memory_space<vmem>>, %arg11: memref<128x128xbf16, #tpu.memory_space<vmem>>, %arg12: memref<128x128xf32, #tpu.memory_space<vmem>>) attributes {dimension_semantics = [#tpu.dimension_semantics<parallel>, #tpu.dimension_semantics<arbitrary>], iteration_bounds = array<i64: 1, 1>, scalar_prefetch = 0 : i64, scratch_operands = 1 : i64, tpu.core_type = #tpu.core_type<tc>, window_params = [{transform_indices = @transform_0, window_bounds = array<i64: 128, 128>}, {pipeline_mode = #tpu.pipeline_mode<synchronous>, transform_indices = @transform_1, window_bounds = array<i64: 128, 128>}, {transform_indices = @transform_2, window_bounds = array<i64: 128, 128>}, {transform_indices = @transform_3, window_bounds = array<i64: 128, 1>}, {transform_indices = @transform_4, window_bounds = array<i64: 128, 1>}, {pipeline_mode = #tpu.pipeline_mode<synchronous>, transform_indices = @transform_5, window_bounds = array<i64: 128, 128>}, {pipeline_mode = #tpu.pipeline_mode<synchronous>, transform_indices = @transform_6, window_bounds = array<i64: 128, 128>}, {pipeline_mode = #tpu.pipeline_mode<synchronous>, transform_indices = @transform_7, window_bounds = array<i64: 1, 128>}, {pipeline_mode = #tpu.pipeline_mode<synchronous>, transform_indices = @transform_8, window_bounds = array<i64: 1, 128>}, {transform_indices = @transform_9, window_bounds = array<i64: 128, 128>}]} {
    %c0_i32 = arith.constant 0 : i32
    %0 = arith.cmpi eq, %arg1, %c0_i32 : i32
    %1 = arith.extui %0 : i1 to i32
    %c0_i32_0 = arith.constant 0 : i32
    %2 = arith.cmpi ne, %1, %c0_i32_0 : i32
    scf.if %2 {
      %cst_9 = arith.constant 0.000000e+00 : f32
      %16 = vector.broadcast %cst_9 : f32 to vector<128x128xf32>
      %c0_10 = arith.constant 0 : index
      %c0_11 = arith.constant 0 : index
      %17 = vector.load %arg12[%c0_10, %c0_11] : memref<128x128xf32, #tpu.memory_space<vmem>>, vector<128x128xf32>
      tpu.vector_store %arg12[%c0_10, %c0_11], %16 {strides = array<i32>} : memref<128x128xf32, #tpu.memory_space<vmem>>, vector<128x128xf32>,
    } else {
    }
    %c128_i32 = arith.constant 128 : i32
    %3 = arith.muli %arg1, %c128_i32 : i32
    %4 = tpu.assume_multiple %3, 128 : i32
    %c0 = arith.constant 0 : index
    %c0_1 = arith.constant 0 : index
    %5 = vector.load %arg2[%c0, %c0_1] : memref<128x128xi8, #tpu.memory_space<vmem>>, vector<128x128xi8>
    %6 = arith.sitofp %5 : vector<128x128xi8> to vector<128x128xbf16>
    %c0_2 = arith.constant 0 : index
    %c0_3 = arith.constant 0 : index
    %7 = vector.load %arg12[%c0_2, %c0_3] : memref<128x128xf32, #tpu.memory_space<vmem>>, vector<128x128xf32>
    %8 = arith.index_cast %4 : i32 to index
    %c0_4 = arith.constant 0 : index
    %9 = vector.load %arg3[%8, %c0_4] : memref<128x128xbf16, #tpu.memory_space<vmem>>, vector<128x128xbf16>
    %cst = arith.constant dense<0.000000e+00> : vector<128x128xf32>
    %10 = tpu.matmul %6, %9, %cst {dimension_numbers = #tpu.dot_dimension_numbers<[1], [0], [0], [1], [0, 0, 1, 1], [], []>} : vector<128x128xbf16>, vector<128x128xbf16>, vector<128x128xf32> -> vector<128x128xf32>
    %11 = arith.addf %7, %10 : vector<128x128xf32>
    %c0_5 = arith.constant 0 : index
    %c0_6 = arith.constant 0 : index
    %12 = vector.load %arg12[%c0_5, %c0_6] : memref<128x128xf32, #tpu.memory_space<vmem>>, vector<128x128xf32>
    tpu.vector_store %arg12[%c0_5, %c0_6], %11 {strides = array<i32>} : memref<128x128xf32, #tpu.memory_space<vmem>>, vector<128x128xf32>,
    %c0_i32_7 = arith.constant 0 : i32
    %13 = arith.cmpi eq, %arg1, %c0_i32_7 : i32
    %14 = arith.extui %13 : i1 to i32
    %c0_i32_8 = arith.constant 0 : i32
    %15 = arith.cmpi ne, %14, %c0_i32_8 : i32
    scf.if %15 {
      %c0_9 = arith.constant 0 : index
      %c0_10 = arith.constant 0 : index
      %16 = vector.load %arg4[%c0_9, %c0_10] : memref<128x128xbf16, #tpu.memory_space<vmem>>, vector<128x128xbf16>
      %c0_11 = arith.constant 0 : index
      %c0_12 = arith.constant 0 : index
      %17 = vector.load %arg12[%c0_11, %c0_12] : memref<128x128xf32, #tpu.memory_space<vmem>>, vector<128x128xf32>
      %c0_13 = arith.constant 0 : index
      %c0_14 = arith.constant 0 : index
      %18 = vector.load %arg5[%c0_13, %c0_14] : memref<128x1xf32, #tpu.memory_space<vmem>>, vector<128x1xf32>
      %19 = vector.broadcast %18 : vector<128x1xf32> to vector<128x128xf32>
      %20 = arith.mulf %17, %19 : vector<128x128xf32>
      %c0_15 = arith.constant 0 : index
      %c0_16 = arith.constant 0 : index
      %21 = vector.load %arg6[%c0_15, %c0_16] : memref<128x1xf32, #tpu.memory_space<vmem>>, vector<128x1xf32>
      %22 = arith.extf %16 : vector<128x128xbf16> to vector<128x128xf32>
      %23 = vector.broadcast %21 : vector<128x1xf32> to vector<128x128xf32>
      %24 = arith.mulf %23, %22 : vector<128x128xf32>
      %25 = arith.addf %20, %24 : vector<128x128xf32>
      %c0_17 = arith.constant 0 : index
      %c0_18 = arith.constant 0 : index
      %26 = vector.load %arg7[%c0_17, %c0_18] : memref<128x128xbf16, #tpu.memory_space<vmem>>, vector<128x128xbf16>
      %cst_19 = arith.constant dense<0.000000e+00> : vector<128x128xf32>
      %27 = tpu.matmul %16, %26, %cst_19 {dimension_numbers = #tpu.dot_dimension_numbers<[1], [0], [0], [1], [0, 0, 1, 1], [], []>} : vector<128x128xbf16>, vector<128x128xbf16>, vector<128x128xf32> -> vector<128x128xf32>
      %28 = arith.truncf %25 : vector<128x128xf32> to vector<128x128xbf16>
      %c0_20 = arith.constant 0 : index
      %c0_21 = arith.constant 0 : index
      %29 = vector.load %arg8[%c0_20, %c0_21] : memref<128x128xbf16, #tpu.memory_space<vmem>>, vector<128x128xbf16>
      %cst_22 = arith.constant dense<0.000000e+00> : vector<128x128xf32>
      %30 = tpu.matmul %28, %29, %cst_22 {dimension_numbers = #tpu.dot_dimension_numbers<[1], [0], [0], [1], [0, 0, 1, 1], [], []>} : vector<128x128xbf16>, vector<128x128xbf16>, vector<128x128xf32> -> vector<128x128xf32>
      %31 = arith.addf %27, %30 : vector<128x128xf32>
      %c0_23 = arith.constant 0 : index
      %c0_24 = arith.constant 0 : index
      %32 = vector.load %arg9[%c0_23, %c0_24] : memref<1x128xf32, #tpu.memory_space<vmem>>, vector<1x128xf32>
      %33 = vector.broadcast %32 : vector<1x128xf32> to vector<128x128xf32>
      %34 = arith.addf %31, %33 : vector<128x128xf32>
      %35 = arith.mulf %34, %34 : vector<128x128xf32>
      %cst_25 = arith.constant dense<0.000000e+00> : vector<128xf32>
      %36 = vector.multi_reduction <add>, %35, %cst_25 [1] : vector<128x128xf32> to vector<128xf32>
      %37 = vector.shape_cast %36 : vector<128xf32> to vector<128x1xf32>
      %cst_26 = arith.constant 1.000000e-24 : f32
      %38 = vector.broadcast %cst_26 : f32 to vector<128x1xf32>
      %39 = arith.maximumf %37, %38 : vector<128x1xf32>
      %40 = math.rsqrt %39 : vector<128x1xf32>
      %41 = vector.broadcast %40 : vector<128x1xf32> to vector<128x128xf32>
      %42 = arith.mulf %34, %41 : vector<128x128xf32>
      %cst_27 = arith.constant 0.000000e+00 : f32
      %43 = vector.broadcast %cst_27 : f32 to vector<128x128xf32>
      %44 = arith.cmpf oge, %42, %43 : vector<128x128xf32>
      %c0_28 = arith.constant 0 : index
      %c0_29 = arith.constant 0 : index
      %45 = vector.load %arg10[%c0_28, %c0_29] : memref<1x128xf32, #tpu.memory_space<vmem>>, vector<1x128xf32>
      %46 = vector.broadcast %45 : vector<1x128xf32> to vector<128x128xf32>
      %47 = arith.mulf %46, %42 : vector<128x128xf32>
      %48 = arith.select %44, %42, %47 : vector<128x128xi1>, vector<128x128xf32>
      %49 = arith.truncf %48 : vector<128x128xf32> to vector<128x128xbf16>
      %c0_30 = arith.constant 0 : index
      %c0_31 = arith.constant 0 : index
      %50 = vector.load %arg11[%c0_30, %c0_31] : memref<128x128xbf16, #tpu.memory_space<vmem>>, vector<128x128xbf16>
      tpu.vector_store %arg11[%c0_30, %c0_31], %49 {strides = array<i32>} : memref<128x128xbf16, #tpu.memory_space<vmem>>, vector<128x128xbf16>,
    } else {
    }
    return
  }
  func.func @transform_0(%arg0: i32, %arg1: i32) -> (i32, i32) {
    %c0_i32 = arith.constant 0 : i32
    return %arg0, %arg1 : i32, i32
  }
  func.func @transform_1(%arg0: i32, %arg1: i32) -> (i32, i32) {
    %c0_i32 = arith.constant 0 : i32
    %c0_i32_0 = arith.constant 0 : i32
    %c0_i32_1 = arith.constant 0 : i32
    return %c0_i32, %c0_i32_0 : i32, i32
  }
  func.func @transform_2(%arg0: i32, %arg1: i32) -> (i32, i32) {
    %c0_i32 = arith.constant 0 : i32
    %c0_i32_0 = arith.constant 0 : i32
    return %arg0, %c0_i32 : i32, i32
  }
  func.func @transform_3(%arg0: i32, %arg1: i32) -> (i32, i32) {
    %c0_i32 = arith.constant 0 : i32
    %c0_i32_0 = arith.constant 0 : i32
    return %arg0, %c0_i32 : i32, i32
  }
  func.func @transform_4(%arg0: i32, %arg1: i32) -> (i32, i32) {
    %c0_i32 = arith.constant 0 : i32
    %c0_i32_0 = arith.constant 0 : i32
    return %arg0, %c0_i32 : i32, i32
  }
  func.func @transform_5(%arg0: i32, %arg1: i32) -> (i32, i32) {
    %c0_i32 = arith.constant 0 : i32
    %c0_i32_0 = arith.constant 0 : i32
    %c0_i32_1 = arith.constant 0 : i32
    return %c0_i32, %c0_i32_0 : i32, i32
  }
  func.func @transform_6(%arg0: i32, %arg1: i32) -> (i32, i32) {
    %c0_i32 = arith.constant 0 : i32
    %c0_i32_0 = arith.constant 0 : i32
    %c0_i32_1 = arith.constant 0 : i32
    return %c0_i32, %c0_i32_0 : i32, i32
  }
  func.func @transform_7(%arg0: i32, %arg1: i32) -> (i32, i32) {
    %c0_i32 = arith.constant 0 : i32
    %c0_i32_0 = arith.constant 0 : i32
    %c0_i32_1 = arith.constant 0 : i32
    return %c0_i32, %c0_i32_0 : i32, i32
  }
  func.func @transform_8(%arg0: i32, %arg1: i32) -> (i32, i32) {
    %c0_i32 = arith.constant 0 : i32
    %c0_i32_0 = arith.constant 0 : i32
    %c0_i32_1 = arith.constant 0 : i32
    return %c0_i32, %c0_i32_0 : i32, i32
  }
  func.func @transform_9(%arg0: i32, %arg1: i32) -> (i32, i32) {
    %c0_i32 = arith.constant 0 : i32
    %c0_i32_0 = arith.constant 0 : i32
    return %arg0, %c0_i32 : i32, i32
  }
}

</mosaic_0001>

<llo_original>
// kernel: encoder_forward.3
$region0: #{encoder_forward.3}
  #allocation0 [shape = 'u32[]', space=smem, size = 0x4, offset = 0x4, fixed_abs, tag = 'smem constant byte address 0x4 - core index']
  #allocation1 [shape = 'u32[144,128]{1,0:T(1,128)}', space=vmem, size = 0x12000, scoped, tag = 'internal scratch']
  #allocation2 [shape = 'f32[128,128]{1,0:T(8,128)}', space=vmem, size = 0x10000, scoped, tag = 'scratch operand']
  %s0 = inlined_call_operand.vmem [shape: s8[128,128], index: 0, kind: input, shape index: {}]
  %s1 = inlined_call_operand.vmem [shape: bf16[128,128], index: 1, kind: input, shape index: {}]
  %s2 = inlined_call_operand.vmem [shape: bf16[128,128], index: 2, kind: input, shape index: {}]
  %s3 = inlined_call_operand.vmem [shape: f32[128,1], index: 3, kind: input, shape index: {}]
  %s4 = inlined_call_operand.vmem [shape: f32[128,1], index: 4, kind: input, shape index: {}]
  %s5 = inlined_call_operand.vmem [shape: bf16[128,128], index: 5, kind: input, shape index: {}]
  %s6 = inlined_call_operand.vmem [shape: bf16[128,128], index: 6, kind: input, shape index: {}]
  %s7 = inlined_call_operand.vmem [shape: f32[1,128], index: 7, kind: input, shape index: {}]
  %s8 = inlined_call_operand.vmem [shape: f32[1,128], index: 8, kind: input, shape index: {}]
  %s9 = inlined_call_operand.vmem [shape: f32[128,128], index: 9, kind: output, shape index: {}]
  %s10 = sld [smem:[#allocation0]]
  $region54: #{encoder_forward.3} parent=0
    _
  %s12 = ssub.s32 1, %s10
  %s13 = scalar_select 0, %s12, %s10
  // Predicated region
  $region2: #{encoder_forward.3} parent=0 // pred_check
    _
  $region3: #{encoder_forward.3} parent=0 // pred_check_branch
    %15 = sbr.rel (0) target = $region5
  $region4: #{encoder_forward.3} parent=0 // pred_region
    _
  $region5: #{encoder_forward.3} parent=0 // pred_fallthru
    _
  // Predicated region
  $region6: #{encoder_forward.3} parent=0 // pred_check
    _
  $region7: #{encoder_forward.3} parent=0 // pred_check_branch
    %17 = sbr.rel (0) target = $region9
  $region8: #{encoder_forward.3} parent=0 // pred_region
    _
  $region9: #{encoder_forward.3} parent=0 // pred_fallthru
    _
  // Predicated region
  $region10: #{encoder_forward.3} parent=0 // pred_check
    _
  $region11: #{encoder_forward.3} parent=0 // pred_check_branch
    %19 = sbr.rel (0) target = $region13
  $region12: #{encoder_forward.3} parent=0 // pred_region
    _
  $region13: #{encoder_forward.3} parent=0 // pred_fallthru
    _
  // Predicated region
  $region14: #{encoder_forward.3} parent=0 // pred_check
    _
  $region15: #{encoder_forward.3} parent=0 // pred_check_branch
    %21 = sbr.rel (0) target = $region17
  $region16: #{encoder_forward.3} parent=0 // pred_region
    _
  $region17: #{encoder_forward.3} parent=0 // pred_fallthru
    _
  // Predicated region
  $region18: #{encoder_forward.3} parent=0 // pred_check
    _
  $region19: #{encoder_forward.3} parent=0 // pred_check_branch
    %23 = sbr.rel (0) target = $region21
  $region20: #{encoder_forward.3} parent=0 // pred_region
    _
  $region21: #{encoder_forward.3} parent=0 // pred_fallthru
    _
  // Predicated region
  $region22: #{encoder_forward.3} parent=0 // pred_check
    _
  $region23: #{encoder_forward.3} parent=0 // pred_check_branch
    %25 = sbr.rel (0) target = $region25
  $region24: #{encoder_forward.3} parent=0 // pred_region
    _
  $region25: #{encoder_forward.3} parent=0 // pred_fallthru
    _
  // Predicated region
  $region26: #{encoder_forward.3} parent=0 // pred_check
    _
  $region27: #{encoder_forward.3} parent=0 // pred_check_branch
    %27 = sbr.rel (0) target = $region29
  $region28: #{encoder_forward.3} parent=0 // pred_region
    _
  $region29: #{encoder_forward.3} parent=0 // pred_fallthru
    _
  // Predicated region
  $region30: #{encoder_forward.3} parent=0 // pred_check
    _
  $region31: #{encoder_forward.3} parent=0 // pred_check_branch
    %29 = sbr.rel (0) target = $region33
  $region32: #{encoder_forward.3} parent=0 // pred_region
    _
  $region33: #{encoder_forward.3} parent=0 // pred_fallthru
    _
  // Predicated region
  $region34: #{encoder_forward.3} parent=0 // pred_check
    _
  $region35: #{encoder_forward.3} parent=0 // pred_check_branch
    %31 = sbr.rel (0) target = $region37
  $region36: #{encoder_forward.3} parent=0 // pred_region
    _
  $region37: #{encoder_forward.3} parent=0 // pred_fallthru
    _
  %p33 = scmp.eq.s32.totalorder 0, 0
  // Predicated region
  $region38: #{encoder_forward.3} parent=0 // pred_check
    %p34 = pneg %p33
  $region39: #{encoder_forward.3} parent=0 // pred_check_branch
    %36 = sbr.rel (%p34) target = $region41
  $region40: #{encoder_forward.3} parent=0 // pred_region
    %37 = vst [vmem:[#allocation2] sm:$0xff] 0.0
    %38 = vst [vmem:[#allocation2 + $0x8] sm:$0xff] 0.0
    %39 = vst [vmem:[#allocation2 + $0x10] sm:$0xff] 0.0
    %40 = vst [vmem:[#allocation2 + $0x18] sm:$0xff] 0.0
    %41 = vst [vmem:[#allocation2 + $0x20] sm:$0xff] 0.0
    %42 = vst [vmem:[#allocation2 + $0x28] sm:$0xff] 0.0
    %43 = vst [vmem:[#allocation2 + $0x30] sm:$0xff] 0.0
    %44 = vst [vmem:[#allocation2 + $0x38] sm:$0xff] 0.0
    %45 = vst [vmem:[#allocation2 + $0x40] sm:$0xff] 0.0
    %46 = vst [vmem:[#allocation2 + $0x48] sm:$0xff] 0.0
    %47 = vst [vmem:[#allocation2 + $0x50] sm:$0xff] 0.0
    %48 = vst [vmem:[#allocation2 + $0x58] sm:$0xff] 0.0
    %49 = vst [vmem:[#allocation2 + $0x60] sm:$0xff] 0.0
    %50 = vst [vmem:[#allocation2 + $0x68] sm:$0xff] 0.0
    %51 = vst [vmem:[#allocation2 + $0x70] sm:$0xff] 0.0
    %52 = vst [vmem:[#allocation2 + $0x78] sm:$0xff] 0.0
  $region41: #{encoder_forward.3} parent=0 // pred_fallthru
    _
  %s53 = smul.u32 0, 128
  %v54 = vld [vmem:[%s0] sm:$0xff]
  %v55 = vld [vmem:[%s0 + $0x8] sm:$0xff]
  %v56 = vld [vmem:[%s0 + $0x10] sm:$0xff]
  %v57 = vld [vmem:[%s0 + $0x18] sm:$0xff]
  %v58 = vunpack.c.l.s8.bf16 %v54
  %v59 = vunpack.c.h.s8.bf16 %v54
  %v60 = vunpack.c.l.s8.bf16 %v55
  %v61 = vunpack.c.h.s8.bf16 %v55
  %v62 = vunpack.c.l.s8.bf16 %v56
  %v63 = vunpack.c.h.s8.bf16 %v56
  %v64 = vunpack.c.l.s8.bf16 %v57
  %v65 = vunpack.c.h.s8.bf16 %v57
  %v66 = vld [vmem:[#allocation2] sm:$0xff]
  %v67 = vld [vmem:[#allocation2 + $0x8] sm:$0xff]
  %v68 = vld [vmem:[#allocation2 + $0x10] sm:$0xff]
  %v69 = vld [vmem:[#allocation2 + $0x18] sm:$0xff]
  %v70 = vld [vmem:[#allocation2 + $0x20] sm:$0xff]
  %v71 = vld [vmem:[#allocation2 + $0x28] sm:$0xff]
  %v72 = vld [vmem:[#allocation2 + $0x30] sm:$0xff]
  %v73 = vld [vmem:[#allocation2 + $0x38] sm:$0xff]
  %v74 = vld [vmem:[#allocation2 + $0x40] sm:$0xff]
  %v75 = vld [vmem:[#allocation2 + $0x48] sm:$0xff]
  %v76 = vld [vmem:[#allocation2 + $0x50] sm:$0xff]
  %v77 = vld [vmem:[#allocation2 + $0x58] sm:$0xff]
  %v78 = vld [vmem:[#allocation2 + $0x60] sm:$0xff]
  %v79 = vld [vmem:[#allocation2 + $0x68] sm:$0xff]
  %v80 = vld [vmem:[#allocation2 + $0x70] sm:$0xff]
  %v81 = vld [vmem:[#allocation2 + $0x78] sm:$0xff]
  %s82 = sshra.s32 %s53, 3
  %s83 = sand.u32 %s53, 7
  %s84 = smul.addr %s82, 4
  %s85 = scalar_lea.vmem %s1, %s84
  %v86 = vld [vmem:[%s85] sm:$0xf]
  %v87 = vld [vmem:[%s85 + $0x4] sm:$0xf]
  %v88 = vld [vmem:[%s85 + $0x8] sm:$0xf]
  %v89 = vld [vmem:[%s85 + $0xc] sm:$0xf]
  %v90 = vld [vmem:[%s85 + $0x10] sm:$0xf]
  %v91 = vld [vmem:[%s85 + $0x14] sm:$0xf]
  %v92 = vld [vmem:[%s85 + $0x18] sm:$0xf]
  %v93 = vld [vmem:[%s85 + $0x1c] sm:$0xf]
  %v94 = vld [vmem:[%s85 + $0x20] sm:$0xf]
  %v95 = vld [vmem:[%s85 + $0x24] sm:$0xf]
  %v96 = vld [vmem:[%s85 + $0x28] sm:$0xf]
  %v97 = vld [vmem:[%s85 + $0x2c] sm:$0xf]
  %v98 = vld [vmem:[%s85 + $0x30] sm:$0xf]
  %v99 = vld [vmem:[%s85 + $0x34] sm:$0xf]
  %v100 = vld [vmem:[%s85 + $0x38] sm:$0xf]
  %v101 = vld [vmem:[%s85 + $0x3c] sm:$0xf]
  %v118 = vunpack.c.l.b16 %v86
  %v119 = vunpack.c.l.b16 %v87
  %v120 = vunpack.c.l.b16 %v88
  %v121 = vunpack.c.l.b16 %v89
  %v122 = vunpack.c.l.b16 %v90
  %v123 = vunpack.c.l.b16 %v91
  %v124 = vunpack.c.l.b16 %v92
  %v125 = vunpack.c.l.b16 %v93
  %v126 = vunpack.c.l.b16 %v94
  %v127 = vunpack.c.l.b16 %v95
  %v128 = vunpack.c.l.b16 %v96
  %v129 = vunpack.c.l.b16 %v97
  %v130 = vunpack.c.l.b16 %v98
  %v131 = vunpack.c.l.b16 %v99
  %v132 = vunpack.c.l.b16 %v100
  %v133 = vunpack.c.l.b16 %v101
  %v134 = vpack.c.b16 %v119, %v118
  %v135 = vpack.c.b16 %v121, %v120
  %v136 = vpack.c.b16 %v123, %v122
  %v137 = vpack.c.b16 %v125, %v124
  %v138 = vpack.c.b16 %v127, %v126
  %v139 = vpack.c.b16 %v129, %v128
  %v140 = vpack.c.b16 %v131, %v130
  %v141 = vpack.c.b16 %v133, %v132
  %150 = vmatprep.subr.bf16.mxu0 0
  %151 = vmatpush1.bf16.msra.mxu0 %v134
  %152 = vmatprep.subr.bf16.mxu0 0
  %153 = vmatpush1.bf16.msra.mxu0 %v135
  %154 = vmatprep.subr.bf16.mxu0 0
  %155 = vmatpush1.bf16.msra.mxu0 %v136
  %156 = vmatprep.subr.bf16.mxu0 0
  %157 = vmatpush1.bf16.msra.mxu0 %v137
  %158 = vmatprep.subr.bf16.mxu0 0
  %159 = vmatpush1.bf16.msra.mxu0 %v138
  %160 = vmatprep.subr.bf16.mxu0 0
  %161 = vmatpush1.bf16.msra.mxu0 %v139
  %162 = vmatprep.subr.bf16.mxu0 0
  %163 = vmatpush1.bf16.msra.mxu0 %v140
  %164 = vmatprep.subr.bf16.mxu0 0
  %165 = vmatpush1.bf16.msra.mxu0 %v141
  %166 = vmatprep.subr.bf16.mxu0 0
  %167 = vmatpush1.bf16.msra.mxu0 0
  %168 = vmatprep.subr.bf16.mxu0 0
  %169 = vmatpush1.bf16.msra.mxu0 0
  %170 = vmatprep.subr.bf16.mxu0 0
  %171 = vmatpush1.bf16.msra.mxu0 0
  %172 = vmatprep.subr.bf16.mxu0 0
  %173 = vmatpush1.bf16.msra.mxu0 0
  %174 = vmatprep.subr.bf16.mxu0 0
  %175 = vmatpush1.bf16.msra.mxu0 0
  %176 = vmatprep.subr.bf16.mxu0 0
  %177 = vmatpush1.bf16.msra.mxu0 0
  %178 = vmatprep.subr.bf16.mxu0 0
  %179 = vmatpush1.bf16.msra.mxu0 0
  %180 = vmatprep.subr.bf16.mxu0 0
  %181 = vmatpush1.bf16.msra.mxu0 0
  %182 = vmatprep.mubr.bf16.mxu0 0
  %183 = vmatmul.mubr.bf16.gmra.mrb[0].mxu0 %v58
  %v184 = vpop.f32.mrb[0].mxu0
  %v185 = vadd.f32 0.0, %v184
  %v186 = vpop.f32.mrb[0].mxu0
  %v187 = vpop.f32.mrb[0].mxu0
  %v188 = vadd.f32 0.0, %v187
  %v189 = vpop.f32.mrb[0].mxu0
  %190 = vmatprep.mubr.bf16.mxu0 0
  %191 = vmatmul.mubr.bf16.gmra.mrb[0].mxu0 %v59
  %v192 = vpop.f32.mrb[0].mxu0
  %v193 = vadd.f32 0.0, %v192
  %v194 = vpop.f32.mrb[0].mxu0
  %v195 = vpop.f32.mrb[0].mxu0
  %v196 = vadd.f32 0.0, %v195
  %v197 = vpop.f32.mrb[0].mxu0
  %198 = vmatprep.mubr.bf16.mxu0 0
  %199 = vmatmul.mubr.bf16.gmra.mrb[0].mxu0 %v60
  %v200 = vpop.f32.mrb[0].mxu0
  %v201 = vadd.f32 0.0, %v200
  %v202 = vpop.f32.mrb[0].mxu0
  %v203 = vpop.f32.mrb[0].mxu0
  %v204 = vadd.f32 0.0, %v203
  %v205 = vpop.f32.mrb[0].mxu0
  %206 = vmatprep.mubr.bf16.mxu0 0
  %207 = vmatmul.mubr.bf16.gmra.mrb[0].mxu0 %v61
  %v208 = vpop.f32.mrb[0].mxu0
  %v209 = vadd.f32 0.0, %v208
  %v210 = vpop.f32.mrb[0].mxu0
  %v211 = vpop.f32.mrb[0].mxu0
  %v212 = vadd.f32 0.0, %v211
  %v213 = vpop.f32.mrb[0].mxu0
  %214 = vmatprep.mubr.bf16.mxu0 0
  %215 = vmatmul.mubr.bf16.gmra.mrb[0].mxu0 %v62
  %v216 = vpop.f32.mrb[0].mxu0
  %v217 = vadd.f32 0.0, %v216
  %v218 = vpop.f32.mrb[0].mxu0
  %v219 = vpop.f32.mrb[0].mxu0
  %v220 = vadd.f32 0.0, %v219
  %v221 = vpop.f32.mrb[0].mxu0
  %222 = vmatprep.mubr.bf16.mxu0 0
  %223 = vmatmul.mubr.bf16.gmra.mrb[0].mxu0 %v63
  %v224 = vpop.f32.mrb[0].mxu0
  %v225 = vadd.f32 0.0, %v224
  %v226 = vpop.f32.mrb[0].mxu0
  %v227 = vpop.f32.mrb[0].mxu0
  %v228 = vadd.f32 0.0, %v227
  %v229 = vpop.f32.mrb[0].mxu0
  %230 = vmatprep.mubr.bf16.mxu0 0
  %231 = vmatmul.mubr.bf16.gmra.mrb[0].mxu0 %v64
  %v232 = vpop.f32.mrb[0].mxu0
  %v233 = vadd.f32 0.0, %v232
  %v234 = vpop.f32.mrb[0].mxu0
  %v235 = vpop.f32.mrb[0].mxu0
  %v236 = vadd.f32 0.0, %v235
  %v237 = vpop.f32.mrb[0].mxu0
  %238 = vmatprep.mubr.bf16.mxu0 0
  %239 = vmatmul.mubr.bf16.gmra.mrb[0].mxu0 %v65
  %v240 = vpop.f32.mrb[0].mxu0
  %v241 = vadd.f32 0.0, %v240
  %v242 = vpop.f32.mrb[0].mxu0
  %v243 = vpop.f32.mrb[0].mxu0
  %v244 = vadd.f32 0.0, %v243
  %v245 = vpop.f32.mrb[0].mxu0
  %246 = vdwg.mxu0
  %v247 = vadd.f32 %v66, %v185
  %v248 = vadd.f32 %v67, %v188
  %v249 = vadd.f32 %v68, %v193
  %v250 = vadd.f32 %v69, %v196
  %v251 = vadd.f32 %v70, %v201
  %v252 = vadd.f32 %v71, %v204
  %v253 = vadd.f32 %v72, %v209
  %v254 = vadd.f32 %v73, %v212
  %v255 = vadd.f32 %v74, %v217
  %v256 = vadd.f32 %v75, %v220
  %v257 = vadd.f32 %v76, %v225
  %v258 = vadd.f32 %v77, %v228
  %v259 = vadd.f32 %v78, %v233
  %v260 = vadd.f32 %v79, %v236
  %v261 = vadd.f32 %v80, %v241
  %v262 = vadd.f32 %v81, %v244
  %263 = vst [vmem:[#allocation2] sm:$0xff] %v247
  %264 = vst [vmem:[#allocation2 + $0x8] sm:$0xff] %v248
  %265 = vst [vmem:[#allocation2 + $0x10] sm:$0xff] %v249
  %266 = vst [vmem:[#allocation2 + $0x18] sm:$0xff] %v250
  %267 = vst [vmem:[#allocation2 + $0x20] sm:$0xff] %v251
  %268 = vst [vmem:[#allocation2 + $0x28] sm:$0xff] %v252
  %269 = vst [vmem:[#allocation2 + $0x30] sm:$0xff] %v253
  %270 = vst [vmem:[#allocation2 + $0x38] sm:$0xff] %v254
  %271 = vst [vmem:[#allocation2 + $0x40] sm:$0xff] %v255
  %272 = vst [vmem:[#allocation2 + $0x48] sm:$0xff] %v256
  %273 = vst [vmem:[#allocation2 + $0x50] sm:$0xff] %v257
  %274 = vst [vmem:[#allocation2 + $0x58] sm:$0xff] %v258
  %275 = vst [vmem:[#allocation2 + $0x60] sm:$0xff] %v259
  %276 = vst [vmem:[#allocation2 + $0x68] sm:$0xff] %v260
  %277 = vst [vmem:[#allocation2 + $0x70] sm:$0xff] %v261
  %278 = vst [vmem:[#allocation2 + $0x78] sm:$0xff] %v262
  // Predicated region
  $region42: #{encoder_forward.3} parent=0 // pred_check
    %p279 = pneg %p33
  $region43: #{encoder_forward.3} parent=0 // pred_check_branch
    %281 = sbr.rel (%p279) target = $region45
  $region44: #{encoder_forward.3} parent=0 // pred_region
    %v282 = vld [vmem:[%s2] sm:$0xf]
    %v283 = vld [vmem:[%s2 + $0x4] sm:$0xf]
    %v284 = vld [vmem:[%s2 + $0x8] sm:$0xf]
    %v285 = vld [vmem:[%s2 + $0xc] sm:$0xf]
    %v286 = vld [vmem:[%s2 + $0x10] sm:$0xf]
    %v287 = vld [vmem:[%s2 + $0x14] sm:$0xf]
    %v288 = vld [vmem:[%s2 + $0x18] sm:$0xf]
    %v289 = vld [vmem:[%s2 + $0x1c] sm:$0xf]
    %v290 = vld [vmem:[%s2 + $0x20] sm:$0xf]
    %v291 = vld [vmem:[%s2 + $0x24] sm:$0xf]
    %v292 = vld [vmem:[%s2 + $0x28] sm:$0xf]
    %v293 = vld [vmem:[%s2 + $0x2c] sm:$0xf]
    %v294 = vld [vmem:[%s2 + $0x30] sm:$0xf]
    %v295 = vld [vmem:[%s2 + $0x34] sm:$0xf]
    %v296 = vld [vmem:[%s2 + $0x38] sm:$0xf]
    %v297 = vld [vmem:[%s2 + $0x3c] sm:$0xf]
    %v298 = vld [vmem:[#allocation2] sm:$0xff]
    %v299 = vld [vmem:[#allocation2 + $0x8] sm:$0xff]
    %v300 = vld [vmem:[#allocation2 + $0x10] sm:$0xff]
    %v301 = vld [vmem:[#allocation2 + $0x18] sm:$0xff]
    %v302 = vld [vmem:[#allocation2 + $0x20] sm:$0xff]
    %v303 = vld [vmem:[#allocation2 + $0x28] sm:$0xff]
    %v304 = vld [vmem:[#allocation2 + $0x30] sm:$0xff]
    %v305 = vld [vmem:[#allocation2 + $0x38] sm:$0xff]
    %v306 = vld [vmem:[#allocation2 + $0x40] sm:$0xff]
    %v307 = vld [vmem:[#allocation2 + $0x48] sm:$0xff]
    %v308 = vld [vmem:[#allocation2 + $0x50] sm:$0xff]
    %v309 = vld [vmem:[#allocation2 + $0x58] sm:$0xff]
    %v310 = vld [vmem:[#allocation2 + $0x60] sm:$0xff]
    %v311 = vld [vmem:[#allocation2 + $0x68] sm:$0xff]
    %v312 = vld [vmem:[#allocation2 + $0x70] sm:$0xff]
    %v313 = vld [vmem:[#allocation2 + $0x78] sm:$0xff]
    %v314 = vld [vmem:[%s3] sm:$0xff]
    %v315 = vld [vmem:[%s3 + $0x8] sm:$0xff]
    %v316 = vld [vmem:[%s3 + $0x10] sm:$0xff]
    %v317 = vld [vmem:[%s3 + $0x18] sm:$0xff]
    %v318 = vld [vmem:[%s3 + $0x20] sm:$0xff]
    %v319 = vld [vmem:[%s3 + $0x28] sm:$0xff]
    %v320 = vld [vmem:[%s3 + $0x30] sm:$0xff]
    %v321 = vld [vmem:[%s3 + $0x38] sm:$0xff]
    %v322 = vld [vmem:[%s3 + $0x40] sm:$0xff]
    %v323 = vld [vmem:[%s3 + $0x48] sm:$0xff]
    %v324 = vld [vmem:[%s3 + $0x50] sm:$0xff]
    %v325 = vld [vmem:[%s3 + $0x58] sm:$0xff]
    %v326 = vld [vmem:[%s3 + $0x60] sm:$0xff]
    %v327 = vld [vmem:[%s3 + $0x68] sm:$0xff]
    %v328 = vld [vmem:[%s3 + $0x70] sm:$0xff]
    %v329 = vld [vmem:[%s3 + $0x78] sm:$0xff]
    %331 = vset.pattern.permute.xlu0 0
    %332 = vperm.xlu0 %331, %v314
    %v333 = vpop.permute.xlu0 %332
    %336 = vset.pattern.permute.xlu0 0
    %337 = vperm.xlu0 %336, %v315
    %v338 = vpop.permute.xlu0 %337
    %341 = vset.pattern.permute.xlu0 0
    %342 = vperm.xlu0 %341, %v316
    %v343 = vpop.permute.xlu0 %342
    %346 = vset.pattern.permute.xlu0 0
    %347 = vperm.xlu0 %346, %v317
    %v348 = vpop.permute.xlu0 %347
    %351 = vset.pattern.permute.xlu0 0
    %352 = vperm.xlu0 %351, %v318
    %v353 = vpop.permute.xlu0 %352
    %356 = vset.pattern.permute.xlu0 0
    %357 = vperm.xlu0 %356, %v319
    %v358 = vpop.permute.xlu0 %357
    %361 = vset.pattern.permute.xlu0 0
    %362 = vperm.xlu0 %361, %v320
    %v363 = vpop.permute.xlu0 %362
    %366 = vset.pattern.permute.xlu0 0
    %367 = vperm.xlu0 %366, %v321
    %v368 = vpop.permute.xlu0 %367
    %371 = vset.pattern.permute.xlu0 0
    %372 = vperm.xlu0 %371, %v322
    %v373 = vpop.permute.xlu0 %372
    %376 = vset.pattern.permute.xlu0 0
    %377 = vperm.xlu0 %376, %v323
    %v378 = vpop.permute.xlu0 %377
    %381 = vset.pattern.permute.xlu0 0
    %382 = vperm.xlu0 %381, %v324
    %v383 = vpop.permute.xlu0 %382
    %386 = vset.pattern.permute.xlu0 0
    %387 = vperm.xlu0 %386, %v325
    %v388 = vpop.permute.xlu0 %387
    %391 = vset.pattern.permute.xlu0 0
    %392 = vperm.xlu0 %391, %v326
    %v393 = vpop.permute.xlu0 %392
    %396 = vset.pattern.permute.xlu0 0
    %397 = vperm.xlu0 %396, %v327
    %v398 = vpop.permute.xlu0 %397
    %401 = vset.pattern.permute.xlu0 0
    %402 = vperm.xlu0 %401, %v328
    %v403 = vpop.permute.xlu0 %402
    %406 = vset.pattern.permute.xlu0 0
    %407 = vperm.xlu0 %406, %v329
    %v408 = vpop.permute.xlu0 %407
    %v410 = vmul.f32 %v298, %v333
    %v411 = vmul.f32 %v299, %v338
    %v412 = vmul.f32 %v300, %v343
    %v413 = vmul.f32 %v301, %v348
    %v414 = vmul.f32 %v302, %v353
    %v415 = vmul.f32 %v303, %v358
    %v416 = vmul.f32 %v304, %v363
    %v417 = vmul.f32 %v305, %v368
    %v418 = vmul.f32 %v306, %v373
    %v419 = vmul.f32 %v307, %v378
    %v420 = vmul.f32 %v308, %v383
    %v421 = vmul.f32 %v309, %v388
    %v422 = vmul.f32 %v310, %v393
    %v423 = vmul.f32 %v311, %v398
    %v424 = vmul.f32 %v312, %v403
    %v425 = vmul.f32 %v313, %v408
    %v426 = vld [vmem:[%s4] sm:$0xff]
    %v427 = vld [vmem:[%s4 + $0x8] sm:$0xff]
    %v428 = vld [vmem:[%s4 + $0x10] sm:$0xff]
    %v429 = vld [vmem:[%s4 + $0x18] sm:$0xff]
    %v430 = vld [vmem:[%s4 + $0x20] sm:$0xff]
    %v431 = vld [vmem:[%s4 + $0x28] sm:$0xff]
    %v432 = vld [vmem:[%s4 + $0x30] sm:$0xff]
    %v433 = vld [vmem:[%s4 + $0x38] sm:$0xff]
    %v434 = vld [vmem:[%s4 + $0x40] sm:$0xff]
    %v435 = vld [vmem:[%s4 + $0x48] sm:$0xff]
    %v436 = vld [vmem:[%s4 + $0x50] sm:$0xff]
    %v437 = vld [vmem:[%s4 + $0x58] sm:$0xff]
    %v438 = vld [vmem:[%s4 + $0x60] sm:$0xff]
    %v439 = vld [vmem:[%s4 + $0x68] sm:$0xff]
    %v440 = vld [vmem:[%s4 + $0x70] sm:$0xff]
    %v441 = vld [vmem:[%s4 + $0x78] sm:$0xff]
    %v442 = vunpack.c.l.bf16 %v282
    %v443 = vunpack.c.l.bf16 %v283
    %v444 = vunpack.c.l.bf16 %v284
    %v445 = vunpack.c.l.bf16 %v285
    %v446 = vunpack.c.l.bf16 %v286
    %v447 = vunpack.c.l.bf16 %v287
    %v448 = vunpack.c.l.bf16 %v288
    %v449 = vunpack.c.l.bf16 %v289
    %v450 = vunpack.c.l.bf16 %v290
    %v451 = vunpack.c.l.bf16 %v291
    %v452 = vunpack.c.l.bf16 %v292
    %v453 = vunpack.c.l.bf16 %v293
    %v454 = vunpack.c.l.bf16 %v294
    %v455 = vunpack.c.l.bf16 %v295
    %v456 = vunpack.c.l.bf16 %v296
    %v457 = vunpack.c.l.bf16 %v297
    %459 = vset.pattern.permute.xlu0 0
    %460 = vperm.xlu0 %459, %v426
    %v461 = vpop.permute.xlu0 %460
    %464 = vset.pattern.permute.xlu0 0
    %465 = vperm.xlu0 %464, %v427
    %v466 = vpop.permute.xlu0 %465
    %469 = vset.pattern.permute.xlu0 0
    %470 = vperm.xlu0 %469, %v428
    %v471 = vpop.permute.xlu0 %470
    %474 = vset.pattern.permute.xlu0 0
    %475 = vperm.xlu0 %474, %v429
    %v476 = vpop.permute.xlu0 %475
    %479 = vset.pattern.permute.xlu0 0
    %480 = vperm.xlu0 %479, %v430
    %v481 = vpop.permute.xlu0 %480
    %484 = vset.pattern.permute.xlu0 0
    %485 = vperm.xlu0 %484, %v431
    %v486 = vpop.permute.xlu0 %485
    %489 = vset.pattern.permute.xlu0 0
    %490 = vperm.xlu0 %489, %v432
    %v491 = vpop.permute.xlu0 %490
    %494 = vset.pattern.permute.xlu0 0
    %495 = vperm.xlu0 %494, %v433
    %v496 = vpop.permute.xlu0 %495
    %499 = vset.pattern.permute.xlu0 0
    %500 = vperm.xlu0 %499, %v434
    %v501 = vpop.permute.xlu0 %500
    %504 = vset.pattern.permute.xlu0 0
    %505 = vperm.xlu0 %504, %v435
    %v506 = vpop.permute.xlu0 %505
    %509 = vset.pattern.permute.xlu0 0
    %510 = vperm.xlu0 %509, %v436
    %v511 = vpop.permute.xlu0 %510
    %514 = vset.pattern.permute.xlu0 0
    %515 = vperm.xlu0 %514, %v437
    %v516 = vpop.permute.xlu0 %515
    %519 = vset.pattern.permute.xlu0 0
    %520 = vperm.xlu0 %519, %v438
    %v521 = vpop.permute.xlu0 %520
    %524 = vset.pattern.permute.xlu0 0
    %525 = vperm.xlu0 %524, %v439
    %v526 = vpop.permute.xlu0 %525
    %529 = vset.pattern.permute.xlu0 0
    %530 = vperm.xlu0 %529, %v440
    %v531 = vpop.permute.xlu0 %530
    %534 = vset.pattern.permute.xlu0 0
    %535 = vperm.xlu0 %534, %v441
    %v536 = vpop.permute.xlu0 %535
    %v538 = vmul.f32 %v461, %v442
    %v539 = vmul.f32 %v466, %v443
    %v540 = vmul.f32 %v471, %v444
    %v541 = vmul.f32 %v476, %v445
    %v542 = vmul.f32 %v481, %v446
    %v543 = vmul.f32 %v486, %v447
    %v544 = vmul.f32 %v491, %v448
    %v545 = vmul.f32 %v496, %v449
    %v546 = vmul.f32 %v501, %v450
    %v547 = vmul.f32 %v506, %v451
    %v548 = vmul.f32 %v511, %v452
    %v549 = vmul.f32 %v516, %v453
    %v550 = vmul.f32 %v521, %v454
    %v551 = vmul.f32 %v526, %v455
    %v552 = vmul.f32 %v531, %v456
    %v553 = vmul.f32 %v536, %v457
    %v554 = vadd.f32 %v410, %v538
    %v555 = vadd.f32 %v411, %v539
    %v556 = vadd.f32 %v412, %v540
    %v557 = vadd.f32 %v413, %v541
    %v558 = vadd.f32 %v414, %v542
    %v559 = vadd.f32 %v415, %v543
    %v560 = vadd.f32 %v416, %v544
    %v561 = vadd.f32 %v417, %v545
    %v562 = vadd.f32 %v418, %v546
    %v563 = vadd.f32 %v419, %v547
    %v564 = vadd.f32 %v420, %v548
    %v565 = vadd.f32 %v421, %v549
    %v566 = vadd.f32 %v422, %v550
    %v567 = vadd.f32 %v423, %v551
    %v568 = vadd.f32 %v424, %v552
    %v569 = vadd.f32 %v425, %v553
    %v570 = vld [vmem:[%s5] sm:$0xf]
    %v571 = vld [vmem:[%s5 + $0x4] sm:$0xf]
    %v572 = vld [vmem:[%s5 + $0x8] sm:$0xf]
    %v573 = vld [vmem:[%s5 + $0xc] sm:$0xf]
    %v574 = vld [vmem:[%s5 + $0x10] sm:$0xf]
    %v575 = vld [vmem:[%s5 + $0x14] sm:$0xf]
    %v576 = vld [vmem:[%s5 + $0x18] sm:$0xf]
    %v577 = vld [vmem:[%s5 + $0x1c] sm:$0xf]
    %v578 = vld [vmem:[%s5 + $0x20] sm:$0xf]
    %v579 = vld [vmem:[%s5 + $0x24] sm:$0xf]
    %v580 = vld [vmem:[%s5 + $0x28] sm:$0xf]
    %v581 = vld [vmem:[%s5 + $0x2c] sm:$0xf]
    %v582 = vld [vmem:[%s5 + $0x30] sm:$0xf]
    %v583 = vld [vmem:[%s5 + $0x34] sm:$0xf]
    %v584 = vld [vmem:[%s5 + $0x38] sm:$0xf]
    %v585 = vld [vmem:[%s5 + $0x3c] sm:$0xf]
    %v586 = vpack.c.bf16 %v555, %v554
    %v587 = vpack.c.bf16 %v557, %v556
    %v588 = vpack.c.bf16 %v559, %v558
    %v589 = vpack.c.bf16 %v561, %v560
    %v590 = vpack.c.bf16 %v563, %v562
    %v591 = vpack.c.bf16 %v565, %v564
    %v592 = vpack.c.bf16 %v567, %v566
    %v593 = vpack.c.bf16 %v569, %v568
    %v594 = vld [vmem:[%s6] sm:$0xf]
    %v595 = vld [vmem:[%s6 + $0x4] sm:$0xf]
    %v596 = vld [vmem:[%s6 + $0x8] sm:$0xf]
    %v597 = vld [vmem:[%s6 + $0xc] sm:$0xf]
    %v598 = vld [vmem:[%s6 + $0x10] sm:$0xf]
    %v599 = vld [vmem:[%s6 + $0x14] sm:$0xf]
    %v600 = vld [vmem:[%s6 + $0x18] sm:$0xf]
    %v601 = vld [vmem:[%s6 + $0x1c] sm:$0xf]
    %v602 = vld [vmem:[%s6 + $0x20] sm:$0xf]
    %v603 = vld [vmem:[%s6 + $0x24] sm:$0xf]
    %v604 = vld [vmem:[%s6 + $0x28] sm:$0xf]
    %v605 = vld [vmem:[%s6 + $0x2c] sm:$0xf]
    %v606 = vld [vmem:[%s6 + $0x30] sm:$0xf]
    %v607 = vld [vmem:[%s6 + $0x34] sm:$0xf]
    %v608 = vld [vmem:[%s6 + $0x38] sm:$0xf]
    %v609 = vld [vmem:[%s6 + $0x3c] sm:$0xf]
    %v626 = vunpack.c.l.b16 %v594
    %v627 = vunpack.c.l.b16 %v595
    %v628 = vunpack.c.l.b16 %v596
    %v629 = vunpack.c.l.b16 %v597
    %v630 = vunpack.c.l.b16 %v598
    %v631 = vunpack.c.l.b16 %v599
    %v632 = vunpack.c.l.b16 %v600
    %v633 = vunpack.c.l.b16 %v601
    %v634 = vunpack.c.l.b16 %v602
    %v635 = vunpack.c.l.b16 %v603
    %v636 = vunpack.c.l.b16 %v604
    %v637 = vunpack.c.l.b16 %v605
    %v638 = vunpack.c.l.b16 %v606
    %v639 = vunpack.c.l.b16 %v607
    %v640 = vunpack.c.l.b16 %v608
    %v641 = vunpack.c.l.b16 %v609
    %v642 = vpack.c.b16 %v627, %v626
    %v643 = vpack.c.b16 %v629, %v628
    %v644 = vpack.c.b16 %v631, %v630
    %v645 = vpack.c.b16 %v633, %v632
    %v646 = vpack.c.b16 %v635, %v634
    %v647 = vpack.c.b16 %v637, %v636
    %v648 = vpack.c.b16 %v639, %v638
    %v649 = vpack.c.b16 %v641, %v640
    %658 = vmatprep.subr.bf16.mxu0 0
    %659 = vmatpush1.bf16.msra.mxu0 %v642
    %660 = vmatprep.subr.bf16.mxu0 0
    %661 = vmatpush1.bf16.msra.mxu0 %v643
    %662 = vmatprep.subr.bf16.mxu0 0
    %663 = vmatpush1.bf16.msra.mxu0 %v644
    %664 = vmatprep.subr.bf16.mxu0 0
    %665 = vmatpush1.bf16.msra.mxu0 %v645
    %666 = vmatprep.subr.bf16.mxu0 0
    %667 = vmatpush1.bf16.msra.mxu0 %v646
    %668 = vmatprep.subr.bf16.mxu0 0
    %669 = vmatpush1.bf16.msra.mxu0 %v647
    %670 = vmatprep.subr.bf16.mxu0 0
    %671 = vmatpush1.bf16.msra.mxu0 %v648
    %672 = vmatprep.subr.bf16.mxu0 0
    %673 = vmatpush1.bf16.msra.mxu0 %v649
    %674 = vmatprep.subr.bf16.mxu0 0
    %675 = vmatpush1.bf16.msra.mxu0 0
    %676 = vmatprep.subr.bf16.mxu0 0
    %677 = vmatpush1.bf16.msra.mxu0 0
    %678 = vmatprep.subr.bf16.mxu0 0
    %679 = vmatpush1.bf16.msra.mxu0 0
    %680 = vmatprep.subr.bf16.mxu0 0
    %681 = vmatpush1.bf16.msra.mxu0 0
    %682 = vmatprep.subr.bf16.mxu0 0
    %683 = vmatpush1.bf16.msra.mxu0 0
    %684 = vmatprep.subr.bf16.mxu0 0
    %685 = vmatpush1.bf16.msra.mxu0 0
    %686 = vmatprep.subr.bf16.mxu0 0
    %687 = vmatpush1.bf16.msra.mxu0 0
    %688 = vmatprep.subr.bf16.mxu0 0
    %689 = vmatpush1.bf16.msra.mxu0 0
    %690 = vmatprep.mubr.bf16.mxu0 0
    %691 = vmatmul.mubr.bf16.gmra.mrb[0].mxu0 %v586
    %v692 = vpop.f32.mrb[0].mxu0
    %v693 = vadd.f32 0.0, %v692
    %v694 = vpop.f32.mrb[0].mxu0
    %v695 = vpop.f32.mrb[0].mxu0
    %v696 = vadd.f32 0.0, %v695
    %v697 = vpop.f32.mrb[0].mxu0
    %698 = vmatprep.mubr.bf16.mxu0 0
    %699 = vmatmul.mubr.bf16.gmra.mrb[0].mxu0 %v587
    %v700 = vpop.f32.mrb[0].mxu0
    %v701 = vadd.f32 0.0, %v700
    %v702 = vpop.f32.mrb[0].mxu0
    %v703 = vpop.f32.mrb[0].mxu0
    %v704 = vadd.f32 0.0, %v703
    %v705 = vpop.f32.mrb[0].mxu0
    %706 = vmatprep.mubr.bf16.mxu0 0
    %707 = vmatmul.mubr.bf16.gmra.mrb[0].mxu0 %v588
    %v708 = vpop.f32.mrb[0].mxu0
    %v709 = vadd.f32 0.0, %v708
    %v710 = vpop.f32.mrb[0].mxu0
    %v711 = vpop.f32.mrb[0].mxu0
    %v712 = vadd.f32 0.0, %v711
    %v713 = vpop.f32.mrb[0].mxu0
    %714 = vmatprep.mubr.bf16.mxu0 0
    %715 = vmatmul.mubr.bf16.gmra.mrb[0].mxu0 %v589
    %v716 = vpop.f32.mrb[0].mxu0
    %v717 = vadd.f32 0.0, %v716
    %v718 = vpop.f32.mrb[0].mxu0
    %v719 = vpop.f32.mrb[0].mxu0
    %v720 = vadd.f32 0.0, %v719
    %v721 = vpop.f32.mrb[0].mxu0
    %722 = vmatprep.mubr.bf16.mxu0 0
    %723 = vmatmul.mubr.bf16.gmra.mrb[0].mxu0 %v590
    %v724 = vpop.f32.mrb[0].mxu0
    %v725 = vadd.f32 0.0, %v724
    %v726 = vpop.f32.mrb[0].mxu0
    %v727 = vpop.f32.mrb[0].mxu0
    %v728 = vadd.f32 0.0, %v727
    %v729 = vpop.f32.mrb[0].mxu0
    %730 = vmatprep.mubr.bf16.mxu0 0
    %731 = vmatmul.mubr.bf16.gmra.mrb[0].mxu0 %v591
    %v732 = vpop.f32.mrb[0].mxu0
    %v733 = vadd.f32 0.0, %v732
    %v734 = vpop.f32.mrb[0].mxu0
    %v735 = vpop.f32.mrb[0].mxu0
    %v736 = vadd.f32 0.0, %v735
    %v737 = vpop.f32.mrb[0].mxu0
    %738 = vmatprep.mubr.bf16.mxu0 0
    %739 = vmatmul.mubr.bf16.gmra.mrb[0].mxu0 %v592
    %v740 = vpop.f32.mrb[0].mxu0
    %v741 = vadd.f32 0.0, %v740
    %v742 = vpop.f32.mrb[0].mxu0
    %v743 = vpop.f32.mrb[0].mxu0
    %v744 = vadd.f32 0.0, %v743
    %v745 = vpop.f32.mrb[0].mxu0
    %746 = vmatprep.mubr.bf16.mxu0 0
    %747 = vmatmul.mubr.bf16.gmra.mrb[0].mxu0 %v593
    %v748 = vpop.f32.mrb[0].mxu0
    %v749 = vadd.f32 0.0, %v748
    %v750 = vpop.f32.mrb[0].mxu0
    %v751 = vpop.f32.mrb[0].mxu0
    %v752 = vadd.f32 0.0, %v751
    %v753 = vpop.f32.mrb[0].mxu0
    %754 = vdwg.mxu0
    %v771 = vunpack.c.l.b16 %v282
    %v772 = vunpack.c.l.b16 %v283
    %v773 = vunpack.c.l.b16 %v284
    %v774 = vunpack.c.l.b16 %v285
    %v775 = vunpack.c.l.b16 %v286
    %v776 = vunpack.c.l.b16 %v287
    %v777 = vunpack.c.l.b16 %v288
    %v778 = vunpack.c.l.b16 %v289
    %v779 = vunpack.c.l.b16 %v290
    %v780 = vunpack.c.l.b16 %v291
    %v781 = vunpack.c.l.b16 %v292
    %v782 = vunpack.c.l.b16 %v293
    %v783 = vunpack.c.l.b16 %v294
    %v784 = vunpack.c.l.b16 %v295
    %v785 = vunpack.c.l.b16 %v296
    %v786 = vunpack.c.l.b16 %v297
    %v787 = vpack.c.b16 %v772, %v771
    %v788 = vpack.c.b16 %v774, %v773
    %v789 = vpack.c.b16 %v776, %v775
    %v790 = vpack.c.b16 %v778, %v777
    %v791 = vpack.c.b16 %v780, %v779
    %v792 = vpack.c.b16 %v782, %v781
    %v793 = vpack.c.b16 %v784, %v783
    %v794 = vpack.c.b16 %v786, %v785
    %v819 = vunpack.c.l.b16 %v570
    %v820 = vunpack.c.l.b16 %v571
    %v821 = vunpack.c.l.b16 %v572
    %v822 = vunpack.c.l.b16 %v573
    %v823 = vunpack.c.l.b16 %v574
    %v824 = vunpack.c.l.b16 %v575
    %v825 = vunpack.c.l.b16 %v576
    %v826 = vunpack.c.l.b16 %v577
    %v827 = vunpack.c.l.b16 %v578
    %v828 = vunpack.c.l.b16 %v579
    %v829 = vunpack.c.l.b16 %v580
    %v830 = vunpack.c.l.b16 %v581
    %v831 = vunpack.c.l.b16 %v582
    %v832 = vunpack.c.l.b16 %v583
    %v833 = vunpack.c.l.b16 %v584
    %v834 = vunpack.c.l.b16 %v585
    %v835 = vpack.c.b16 %v820, %v819
    %v836 = vpack.c.b16 %v822, %v821
    %v837 = vpack.c.b16 %v824, %v823
    %v838 = vpack.c.b16 %v826, %v825
    %v839 = vpack.c.b16 %v828, %v827
    %v840 = vpack.c.b16 %v830, %v829
    %v841 = vpack.c.b16 %v832, %v831
    %v842 = vpack.c.b16 %v834, %v833
    %851 = vmatprep.subr.bf16.mxu0 0
    %852 = vmatpush1.bf16.msra.mxu0 %v835
    %853 = vmatprep.subr.bf16.mxu0 0
    %854 = vmatpush1.bf16.msra.mxu0 %v836
    %855 = vmatprep.subr.bf16.mxu0 0
    %856 = vmatpush1.bf16.msra.mxu0 %v837
    %857 = vmatprep.subr.bf16.mxu0 0
    %858 = vmatpush1.bf16.msra.mxu0 %v838
    %859 = vmatprep.subr.bf16.mxu0 0
    %860 = vmatpush1.bf16.msra.mxu0 %v839
    %861 = vmatprep.subr.bf16.mxu0 0
    %862 = vmatpush1.bf16.msra.mxu0 %v840
    %863 = vmatprep.subr.bf16.mxu0 0
    %864 = vmatpush1.bf16.msra.mxu0 %v841
    %865 = vmatprep.subr.bf16.mxu0 0
    %866 = vmatpush1.bf16.msra.mxu0 %v842
    %867 = vmatprep.subr.bf16.mxu0 0
    %868 = vmatpush1.bf16.msra.mxu0 0
    %869 = vmatprep.subr.bf16.mxu0 0
    %870 = vmatpush1.bf16.msra.mxu0 0
    %871 = vmatprep.subr.bf16.mxu0 0
    %872 = vmatpush1.bf16.msra.mxu0 0
    %873 = vmatprep.subr.bf16.mxu0 0
    %874 = vmatpush1.bf16.msra.mxu0 0
    %875 = vmatprep.subr.bf16.mxu0 0
    %876 = vmatpush1.bf16.msra.mxu0 0
    %877 = vmatprep.subr.bf16.mxu0 0
    %878 = vmatpush1.bf16.msra.mxu0 0
    %879 = vmatprep.subr.bf16.mxu0 0
    %880 = vmatpush1.bf16.msra.mxu0 0
    %881 = vmatprep.subr.bf16.mxu0 0
    %882 = vmatpush1.bf16.msra.mxu0 0
    %883 = vmatprep.mubr.bf16.mxu0 0
    %884 = vmatmul.mubr.bf16.gmra.mrb[0].mxu0 %v787
    %v885 = vpop.f32.mrb[0].mxu0
    %v886 = vadd.f32 %v693, %v885
    %v887 = vpop.f32.mrb[0].mxu0
    %v888 = vpop.f32.mrb[0].mxu0
    %v889 = vadd.f32 %v696, %v888
    %v890 = vpop.f32.mrb[0].mxu0
    %891 = vmatprep.mubr.bf16.mxu0 0
    %892 = vmatmul.mubr.bf16.gmra.mrb[0].mxu0 %v788
    %v893 = vpop.f32.mrb[0].mxu0
    %v894 = vadd.f32 %v701, %v893
    %v895 = vpop.f32.mrb[0].mxu0
    %v896 = vpop.f32.mrb[0].mxu0
    %v897 = vadd.f32 %v704, %v896
    %v898 = vpop.f32.mrb[0].mxu0
    %899 = vmatprep.mubr.bf16.mxu0 0
    %900 = vmatmul.mubr.bf16.gmra.mrb[0].mxu0 %v789
    %v901 = vpop.f32.mrb[0].mxu0
    %v902 = vadd.f32 %v709, %v901
    %v903 = vpop.f32.mrb[0].mxu0
    %v904 = vpop.f32.mrb[0].mxu0
    %v905 = vadd.f32 %v712, %v904
    %v906 = vpop.f32.mrb[0].mxu0
    %907 = vmatprep.mubr.bf16.mxu0 0
    %908 = vmatmul.mubr.bf16.gmra.mrb[0].mxu0 %v790
    %v909 = vpop.f32.mrb[0].mxu0
    %v910 = vadd.f32 %v717, %v909
    %v911 = vpop.f32.mrb[0].mxu0
    %v912 = vpop.f32.mrb[0].mxu0
    %v913 = vadd.f32 %v720, %v912
    %v914 = vpop.f32.mrb[0].mxu0
    %915 = vmatprep.mubr.bf16.mxu0 0
    %916 = vmatmul.mubr.bf16.gmra.mrb[0].mxu0 %v791
    %v917 = vpop.f32.mrb[0].mxu0
    %v918 = vadd.f32 %v725, %v917
    %v919 = vpop.f32.mrb[0].mxu0
    %v920 = vpop.f32.mrb[0].mxu0
    %v921 = vadd.f32 %v728, %v920
    %v922 = vpop.f32.mrb[0].mxu0
    %923 = vmatprep.mubr.bf16.mxu0 0
    %924 = vmatmul.mubr.bf16.gmra.mrb[0].mxu0 %v792
    %v925 = vpop.f32.mrb[0].mxu0
    %v926 = vadd.f32 %v733, %v925
    %v927 = vpop.f32.mrb[0].mxu0
    %v928 = vpop.f32.mrb[0].mxu0
    %v929 = vadd.f32 %v736, %v928
    %v930 = vpop.f32.mrb[0].mxu0
    %931 = vmatprep.mubr.bf16.mxu0 0
    %932 = vmatmul.mubr.bf16.gmra.mrb[0].mxu0 %v793
    %v933 = vpop.f32.mrb[0].mxu0
    %v934 = vadd.f32 %v741, %v933
    %v935 = vpop.f32.mrb[0].mxu0
    %v936 = vpop.f32.mrb[0].mxu0
    %v937 = vadd.f32 %v744, %v936
    %v938 = vpop.f32.mrb[0].mxu0
    %939 = vmatprep.mubr.bf16.mxu0 0
    %940 = vmatmul.mubr.bf16.gmra.mrb[0].mxu0 %v794
    %v941 = vpop.f32.mrb[0].mxu0
    %v942 = vadd.f32 %v749, %v941
    %v943 = vpop.f32.mrb[0].mxu0
    %v944 = vpop.f32.mrb[0].mxu0
    %v945 = vadd.f32 %v752, %v944
    %v946 = vpop.f32.mrb[0].mxu0
    %947 = vdwg.mxu0
    %v948 = vld [vmem:[%s7] sm:$0x1]
    %v950 = vlaneseq
    %v951 = vshrl.u32 %v950, 7
    %v952 = vsub.s32 0, %v951
    %v953 = vrot.slane %v948, %v952
    %v955 = vadd.f32 %v886, %v953
    %v956 = vadd.f32 %v889, %v953
    %v957 = vadd.f32 %v894, %v953
    %v958 = vadd.f32 %v897, %v953
    %v959 = vadd.f32 %v902, %v953
    %v960 = vadd.f32 %v905, %v953
    %v961 = vadd.f32 %v910, %v953
    %v962 = vadd.f32 %v913, %v953
    %v963 = vadd.f32 %v918, %v953
    %v964 = vadd.f32 %v921, %v953
    %v965 = vadd.f32 %v926, %v953
    %v966 = vadd.f32 %v929, %v953
    %v967 = vadd.f32 %v934, %v953
    %v968 = vadd.f32 %v937, %v953
    %v969 = vadd.f32 %v942, %v953
    %v970 = vadd.f32 %v945, %v953
    %vm971 = vcmp.ge.f32.partialorder %v955, 0.0
    %vm972 = vcmp.ge.f32.partialorder %v956, 0.0
    %vm973 = vcmp.ge.f32.partialorder %v957, 0.0
    %vm974 = vcmp.ge.f32.partialorder %v958, 0.0
    %vm975 = vcmp.ge.f32.partialorder %v959, 0.0
    %vm976 = vcmp.ge.f32.partialorder %v960, 0.0
    %vm977 = vcmp.ge.f32.partialorder %v961, 0.0
    %vm978 = vcmp.ge.f32.partialorder %v962, 0.0
    %vm979 = vcmp.ge.f32.partialorder %v963, 0.0
    %vm980 = vcmp.ge.f32.partialorder %v964, 0.0
    %vm981 = vcmp.ge.f32.partialorder %v965, 0.0
    %vm982 = vcmp.ge.f32.partialorder %v966, 0.0
    %vm983 = vcmp.ge.f32.partialorder %v967, 0.0
    %vm984 = vcmp.ge.f32.partialorder %v968, 0.0
    %vm985 = vcmp.ge.f32.partialorder %v969, 0.0
    %vm986 = vcmp.ge.f32.partialorder %v970, 0.0
    %v987 = vld [vmem:[%s8] sm:$0x1]
    %v989 = vlaneseq
    %v990 = vshrl.u32 %v989, 7
    %v991 = vsub.s32 0, %v990
    %v992 = vrot.slane %v987, %v991
    %v994 = vmul.f32 %v992, %v955
    %v995 = vmul.f32 %v992, %v956
    %v996 = vmul.f32 %v992, %v957
    %v997 = vmul.f32 %v992, %v958
    %v998 = vmul.f32 %v992, %v959
    %v999 = vmul.f32 %v992, %v960
    %v1000 = vmul.f32 %v992, %v961
    %v1001 = vmul.f32 %v992, %v962
    %v1002 = vmul.f32 %v992, %v963
    %v1003 = vmul.f32 %v992, %v964
    %v1004 = vmul.f32 %v992, %v965
    %v1005 = vmul.f32 %v992, %v966
    %v1006 = vmul.f32 %v992, %v967
    %v1007 = vmul.f32 %v992, %v968
    %v1008 = vmul.f32 %v992, %v969
    %v1009 = vmul.f32 %v992, %v970
    %v1010 = vsel %vm971, %v955, %v994
    %v1011 = vsel %vm972, %v956, %v995
    %v1012 = vsel %vm973, %v957, %v996
    %v1013 = vsel %vm974, %v958, %v997
    %v1014 = vsel %vm975, %v959, %v998
    %v1015 = vsel %vm976, %v960, %v999
    %v1016 = vsel %vm977, %v961, %v1000
    %v1017 = vsel %vm978, %v962, %v1001
    %v1018 = vsel %vm979, %v963, %v1002
    %v1019 = vsel %vm980, %v964, %v1003
    %v1020 = vsel %vm981, %v965, %v1004
    %v1021 = vsel %vm982, %v966, %v1005
    %v1022 = vsel %vm983, %v967, %v1006
    %v1023 = vsel %vm984, %v968, %v1007
    %v1024 = vsel %vm985, %v969, %v1008
    %v1025 = vsel %vm986, %v970, %v1009
    %1026 = vst [vmem:[%s9] sm:$0xff] %v1010
    %1027 = vst [vmem:[%s9 + $0x8] sm:$0xff] %v1011
    %1028 = vst [vmem:[%s9 + $0x10] sm:$0xff] %v1012
    %1029 = vst [vmem:[%s9 + $0x18] sm:$0xff] %v1013
    %1030 = vst [vmem:[%s9 + $0x20] sm:$0xff] %v1014
    %1031 = vst [vmem:[%s9 + $0x28] sm:$0xff] %v1015
    %1032 = vst [vmem:[%s9 + $0x30] sm:$0xff] %v1016
    %1033 = vst [vmem:[%s9 + $0x38] sm:$0xff] %v1017
    %1034 = vst [vmem:[%s9 + $0x40] sm:$0xff] %v1018
    %1035 = vst [vmem:[%s9 + $0x48] sm:$0xff] %v1019
    %1036 = vst [vmem:[%s9 + $0x50] sm:$0xff] %v1020
    %1037 = vst [vmem:[%s9 + $0x58] sm:$0xff] %v1021
    %1038 = vst [vmem:[%s9 + $0x60] sm:$0xff] %v1022
    %1039 = vst [vmem:[%s9 + $0x68] sm:$0xff] %v1023
    %1040 = vst [vmem:[%s9 + $0x70] sm:$0xff] %v1024
    %1041 = vst [vmem:[%s9 + $0x78] sm:$0xff] %v1025
  $region45: #{encoder_forward.3} parent=0 // pred_fallthru
    _
  // Predicated region
  $region46: #{encoder_forward.3} parent=0 // pred_check
    _
  $region47: #{encoder_forward.3} parent=0 // pred_check_branch
    %1043 = sbr.rel (0) target = $region49
  $region48: #{encoder_forward.3} parent=0 // pred_region
    _
  $region49: #{encoder_forward.3} parent=0 // pred_fallthru
    _
  // Predicated region
  $region50: #{encoder_forward.3} parent=0 // pred_check
    _
  $region51: #{encoder_forward.3} parent=0 // pred_check_branch
    %1045 = sbr.rel (0) target = $region53
  $region52: #{encoder_forward.3} parent=0 // pred_region
    _
  $region53: #{encoder_forward.3} parent=0 // pred_fallthru
    _

// kernel: encoder_forward.2
$region0: #{encoder_forward.2}
  #allocation0 [shape = 'u32[]', space=smem, size = 0x4, offset = 0x4, fixed_abs, tag = 'smem constant byte address 0x4 - core index']
  #allocation1 [shape = 'u32[144,128]{1,0:T(1,128)}', space=vmem, size = 0x12000, scoped, tag = 'internal scratch']
  #allocation2 [shape = 'f32[128,128]{1,0:T(8,128)}', space=vmem, size = 0x10000, scoped, tag = 'scratch operand']
  %s0 = inlined_call_operand.vmem [shape: s8[128,128], index: 0, kind: input, shape index: {}]
  %s1 = inlined_call_operand.vmem [shape: bf16[128,128], index: 1, kind: input, shape index: {}, may-alias: {1,2}]
  %s2 = inlined_call_operand.vmem [shape: bf16[128,128], index: 2, kind: input, shape index: {}, may-alias: {1,2}]
  %s3 = inlined_call_operand.vmem [shape: f32[128,1], index: 3, kind: input, shape index: {}]
  %s4 = inlined_call_operand.vmem [shape: f32[128,1], index: 4, kind: input, shape index: {}]
  %s5 = inlined_call_operand.vmem [shape: bf16[128,128], index: 5, kind: input, shape index: {}]
  %s6 = inlined_call_operand.vmem [shape: bf16[128,128], index: 6, kind: input, shape index: {}]
  %s7 = inlined_call_operand.vmem [shape: f32[1,128], index: 7, kind: input, shape index: {}]
  %s8 = inlined_call_operand.vmem [shape: f32[1,128], index: 8, kind: input, shape index: {}]
  %s9 = inlined_call_operand.vmem [shape: bf16[128,128], index: 9, kind: output, shape index: {}]
  %s10 = sld [smem:[#allocation0]]
  $region54: #{encoder_forward.2} parent=0
    _
  %s12 = ssub.s32 1, %s10
  %s13 = scalar_select 0, %s12, %s10
  // Predicated region
  $region2: #{encoder_forward.2} parent=0 // pred_check
    _
  $region3: #{encoder_forward.2} parent=0 // pred_check_branch
    %15 = sbr.rel (0) target = $region5
  $region4: #{encoder_forward.2} parent=0 // pred_region
    _
  $region5: #{encoder_forward.2} parent=0 // pred_fallthru
    _
  // Predicated region
  $region6: #{encoder_forward.2} parent=0 // pred_check
    _
  $region7: #{encoder_forward.2} parent=0 // pred_check_branch
    %17 = sbr.rel (0) target = $region9
  $region8: #{encoder_forward.2} parent=0 // pred_region
    _
  $region9: #{encoder_forward.2} parent=0 // pred_fallthru
    _
  // Predicated region
  $region10: #{encoder_forward.2} parent=0 // pred_check
    _
  $region11: #{encoder_forward.2} parent=0 // pred_check_branch
    %19 = sbr.rel (0) target = $region13
  $region12: #{encoder_forward.2} parent=0 // pred_region
    _
  $region13: #{encoder_forward.2} parent=0 // pred_fallthru
    _
  // Predicated region
  $region14: #{encoder_forward.2} parent=0 // pred_check
    _
  $region15: #{encoder_forward.2} parent=0 // pred_check_branch
    %21 = sbr.rel (0) target = $region17
  $region16: #{encoder_forward.2} parent=0 // pred_region
    _
  $region17: #{encoder_forward.2} parent=0 // pred_fallthru
    _
  // Predicated region
  $region18: #{encoder_forward.2} parent=0 // pred_check
    _
  $region19: #{encoder_forward.2} parent=0 // pred_check_branch
    %23 = sbr.rel (0) target = $region21
  $region20: #{encoder_forward.2} parent=0 // pred_region
    _
  $region21: #{encoder_forward.2} parent=0 // pred_fallthru
    _
  // Predicated region
  $region22: #{encoder_forward.2} parent=0 // pred_check
    _
  $region23: #{encoder_forward.2} parent=0 // pred_check_branch
    %25 = sbr.rel (0) target = $region25
  $region24: #{encoder_forward.2} parent=0 // pred_region
    _
  $region25: #{encoder_forward.2} parent=0 // pred_fallthru
    _
  // Predicated region
  $region26: #{encoder_forward.2} parent=0 // pred_check
    _
  $region27: #{encoder_forward.2} parent=0 // pred_check_branch
    %27 = sbr.rel (0) target = $region29
  $region28: #{encoder_forward.2} parent=0 // pred_region
    _
  $region29: #{encoder_forward.2} parent=0 // pred_fallthru
    _
  // Predicated region
  $region30: #{encoder_forward.2} parent=0 // pred_check
    _
  $region31: #{encoder_forward.2} parent=0 // pred_check_branch
    %29 = sbr.rel (0) target = $region33
  $region32: #{encoder_forward.2} parent=0 // pred_region
    _
  $region33: #{encoder_forward.2} parent=0 // pred_fallthru
    _
  // Predicated region
  $region34: #{encoder_forward.2} parent=0 // pred_check
    _
  $region35: #{encoder_forward.2} parent=0 // pred_check_branch
    %31 = sbr.rel (0) target = $region37
  $region36: #{encoder_forward.2} parent=0 // pred_region
    _
  $region37: #{encoder_forward.2} parent=0 // pred_fallthru
    _
  %p33 = scmp.eq.s32.totalorder 0, 0
  // Predicated region
  $region38: #{encoder_forward.2} parent=0 // pred_check
    %p34 = pneg %p33
  $region39: #{encoder_forward.2} parent=0 // pred_check_branch
    %36 = sbr.rel (%p34) target = $region41
  $region40: #{encoder_forward.2} parent=0 // pred_region
    %37 = vst [vmem:[#allocation2] sm:$0xff] 0.0
    %38 = vst [vmem:[#allocation2 + $0x8] sm:$0xff] 0.0
    %39 = vst [vmem:[#allocation2 + $0x10] sm:$0xff] 0.0
    %40 = vst [vmem:[#allocation2 + $0x18] sm:$0xff] 0.0
    %41 = vst [vmem:[#allocation2 + $0x20] sm:$0xff] 0.0
    %42 = vst [vmem:[#allocation2 + $0x28] sm:$0xff] 0.0
    %43 = vst [vmem:[#allocation2 + $0x30] sm:$0xff] 0.0
    %44 = vst [vmem:[#allocation2 + $0x38] sm:$0xff] 0.0
    %45 = vst [vmem:[#allocation2 + $0x40] sm:$0xff] 0.0
    %46 = vst [vmem:[#allocation2 + $0x48] sm:$0xff] 0.0
    %47 = vst [vmem:[#allocation2 + $0x50] sm:$0xff] 0.0
    %48 = vst [vmem:[#allocation2 + $0x58] sm:$0xff] 0.0
    %49 = vst [vmem:[#allocation2 + $0x60] sm:$0xff] 0.0
    %50 = vst [vmem:[#allocation2 + $0x68] sm:$0xff] 0.0
    %51 = vst [vmem:[#allocation2 + $0x70] sm:$0xff] 0.0
    %52 = vst [vmem:[#allocation2 + $0x78] sm:$0xff] 0.0
  $region41: #{encoder_forward.2} parent=0 // pred_fallthru
    _
  %s53 = smul.u32 0, 128
  %v54 = vld [vmem:[%s0] sm:$0xff]
  %v55 = vld [vmem:[%s0 + $0x8] sm:$0xff]
  %v56 = vld [vmem:[%s0 + $0x10] sm:$0xff]
  %v57 = vld [vmem:[%s0 + $0x18] sm:$0xff]
  %v58 = vunpack.c.l.s8.bf16 %v54
  %v59 = vunpack.c.h.s8.bf16 %v54
  %v60 = vunpack.c.l.s8.bf16 %v55
  %v61 = vunpack.c.h.s8.bf16 %v55
  %v62 = vunpack.c.l.s8.bf16 %v56
  %v63 = vunpack.c.h.s8.bf16 %v56
  %v64 = vunpack.c.l.s8.bf16 %v57
  %v65 = vunpack.c.h.s8.bf16 %v57
  %v66 = vld [vmem:[#allocation2] sm:$0xff]
  %v67 = vld [vmem:[#allocation2 + $0x8] sm:$0xff]
  %v68 = vld [vmem:[#allocation2 + $0x10] sm:$0xff]
  %v69 = vld [vmem:[#allocation2 + $0x18] sm:$0xff]
  %v70 = vld [vmem:[#allocation2 + $0x20] sm:$0xff]
  %v71 = vld [vmem:[#allocation2 + $0x28] sm:$0xff]
  %v72 = vld [vmem:[#allocation2 + $0x30] sm:$0xff]
  %v73 = vld [vmem:[#allocation2 + $0x38] sm:$0xff]
  %v74 = vld [vmem:[#allocation2 + $0x40] sm:$0xff]
  %v75 = vld [vmem:[#allocation2 + $0x48] sm:$0xff]
  %v76 = vld [vmem:[#allocation2 + $0x50] sm:$0xff]
  %v77 = vld [vmem:[#allocation2 + $0x58] sm:$0xff]
  %v78 = vld [vmem:[#allocation2 + $0x60] sm:$0xff]
  %v79 = vld [vmem:[#allocation2 + $0x68] sm:$0xff]
  %v80 = vld [vmem:[#allocation2 + $0x70] sm:$0xff]
  %v81 = vld [vmem:[#allocation2 + $0x78] sm:$0xff]
  %s82 = sshra.s32 %s53, 3
  %s83 = sand.u32 %s53, 7
  %s84 = smul.addr %s82, 4
  %s85 = scalar_lea.vmem %s1, %s84
  %v86 = vld [vmem:[%s85] sm:$0xf]
  %v87 = vld [vmem:[%s85 + $0x4] sm:$0xf]
  %v88 = vld [vmem:[%s85 + $0x8] sm:$0xf]
  %v89 = vld [vmem:[%s85 + $0xc] sm:$0xf]
  %v90 = vld [vmem:[%s85 + $0x10] sm:$0xf]
  %v91 = vld [vmem:[%s85 + $0x14] sm:$0xf]
  %v92 = vld [vmem:[%s85 + $0x18] sm:$0xf]
  %v93 = vld [vmem:[%s85 + $0x1c] sm:$0xf]
  %v94 = vld [vmem:[%s85 + $0x20] sm:$0xf]
  %v95 = vld [vmem:[%s85 + $0x24] sm:$0xf]
  %v96 = vld [vmem:[%s85 + $0x28] sm:$0xf]
  %v97 = vld [vmem:[%s85 + $0x2c] sm:$0xf]
  %v98 = vld [vmem:[%s85 + $0x30] sm:$0xf]
  %v99 = vld [vmem:[%s85 + $0x34] sm:$0xf]
  %v100 = vld [vmem:[%s85 + $0x38] sm:$0xf]
  %v101 = vld [vmem:[%s85 + $0x3c] sm:$0xf]
  %v118 = vunpack.c.l.b16 %v86
  %v119 = vunpack.c.l.b16 %v87
  %v120 = vunpack.c.l.b16 %v88
  %v121 = vunpack.c.l.b16 %v89
  %v122 = vunpack.c.l.b16 %v90
  %v123 = vunpack.c.l.b16 %v91
  %v124 = vunpack.c.l.b16 %v92
  %v125 = vunpack.c.l.b16 %v93
  %v126 = vunpack.c.l.b16 %v94
  %v127 = vunpack.c.l.b16 %v95
  %v128 = vunpack.c.l.b16 %v96
  %v129 = vunpack.c.l.b16 %v97
  %v130 = vunpack.c.l.b16 %v98
  %v131 = vunpack.c.l.b16 %v99
  %v132 = vunpack.c.l.b16 %v100
  %v133 = vunpack.c.l.b16 %v101
  %v134 = vpack.c.b16 %v119, %v118
  %v135 = vpack.c.b16 %v121, %v120
  %v136 = vpack.c.b16 %v123, %v122
  %v137 = vpack.c.b16 %v125, %v124
  %v138 = vpack.c.b16 %v127, %v126
  %v139 = vpack.c.b16 %v129, %v128
  %v140 = vpack.c.b16 %v131, %v130
  %v141 = vpack.c.b16 %v133, %v132
  %150 = vmatprep.subr.bf16.mxu0 0
  %151 = vmatpush1.bf16.msra.mxu0 %v134
  %152 = vmatprep.subr.bf16.mxu0 0
  %153 = vmatpush1.bf16.msra.mxu0 %v135
  %154 = vmatprep.subr.bf16.mxu0 0
  %155 = vmatpush1.bf16.msra.mxu0 %v136
  %156 = vmatprep.subr.bf16.mxu0 0
  %157 = vmatpush1.bf16.msra.mxu0 %v137
  %158 = vmatprep.subr.bf16.mxu0 0
  %159 = vmatpush1.bf16.msra.mxu0 %v138
  %160 = vmatprep.subr.bf16.mxu0 0
  %161 = vmatpush1.bf16.msra.mxu0 %v139
  %162 = vmatprep.subr.bf16.mxu0 0
  %163 = vmatpush1.bf16.msra.mxu0 %v140
  %164 = vmatprep.subr.bf16.mxu0 0
  %165 = vmatpush1.bf16.msra.mxu0 %v141
  %166 = vmatprep.subr.bf16.mxu0 0
  %167 = vmatpush1.bf16.msra.mxu0 0
  %168 = vmatprep.subr.bf16.mxu0 0
  %169 = vmatpush1.bf16.msra.mxu0 0
  %170 = vmatprep.subr.bf16.mxu0 0
  %171 = vmatpush1.bf16.msra.mxu0 0
  %172 = vmatprep.subr.bf16.mxu0 0
  %173 = vmatpush1.bf16.msra.mxu0 0
  %174 = vmatprep.subr.bf16.mxu0 0
  %175 = vmatpush1.bf16.msra.mxu0 0
  %176 = vmatprep.subr.bf16.mxu0 0
  %177 = vmatpush1.bf16.msra.mxu0 0
  %178 = vmatprep.subr.bf16.mxu0 0
  %179 = vmatpush1.bf16.msra.mxu0 0
  %180 = vmatprep.subr.bf16.mxu0 0
  %181 = vmatpush1.bf16.msra.mxu0 0
  %182 = vmatprep.mubr.bf16.mxu0 0
  %183 = vmatmul.mubr.bf16.gmra.mrb[0].mxu0 %v58
  %v184 = vpop.f32.mrb[0].mxu0
  %v185 = vadd.f32 0.0, %v184
  %v186 = vpop.f32.mrb[0].mxu0
  %v187 = vpop.f32.mrb[0].mxu0
  %v188 = vadd.f32 0.0, %v187
  %v189 = vpop.f32.mrb[0].mxu0
  %190 = vmatprep.mubr.bf16.mxu0 0
  %191 = vmatmul.mubr.bf16.gmra.mrb[0].mxu0 %v59
  %v192 = vpop.f32.mrb[0].mxu0
  %v193 = vadd.f32 0.0, %v192
  %v194 = vpop.f32.mrb[0].mxu0
  %v195 = vpop.f32.mrb[0].mxu0
  %v196 = vadd.f32 0.0, %v195
  %v197 = vpop.f32.mrb[0].mxu0
  %198 = vmatprep.mubr.bf16.mxu0 0
  %199 = vmatmul.mubr.bf16.gmra.mrb[0].mxu0 %v60
  %v200 = vpop.f32.mrb[0].mxu0
  %v201 = vadd.f32 0.0, %v200
  %v202 = vpop.f32.mrb[0].mxu0
  %v203 = vpop.f32.mrb[0].mxu0
  %v204 = vadd.f32 0.0, %v203
  %v205 = vpop.f32.mrb[0].mxu0
  %206 = vmatprep.mubr.bf16.mxu0 0
  %207 = vmatmul.mubr.bf16.gmra.mrb[0].mxu0 %v61
  %v208 = vpop.f32.mrb[0].mxu0
  %v209 = vadd.f32 0.0, %v208
  %v210 = vpop.f32.mrb[0].mxu0
  %v211 = vpop.f32.mrb[0].mxu0
  %v212 = vadd.f32 0.0, %v211
  %v213 = vpop.f32.mrb[0].mxu0
  %214 = vmatprep.mubr.bf16.mxu0 0
  %215 = vmatmul.mubr.bf16.gmra.mrb[0].mxu0 %v62
  %v216 = vpop.f32.mrb[0].mxu0
  %v217 = vadd.f32 0.0, %v216
  %v218 = vpop.f32.mrb[0].mxu0
  %v219 = vpop.f32.mrb[0].mxu0
  %v220 = vadd.f32 0.0, %v219
  %v221 = vpop.f32.mrb[0].mxu0
  %222 = vmatprep.mubr.bf16.mxu0 0
  %223 = vmatmul.mubr.bf16.gmra.mrb[0].mxu0 %v63
  %v224 = vpop.f32.mrb[0].mxu0
  %v225 = vadd.f32 0.0, %v224
  %v226 = vpop.f32.mrb[0].mxu0
  %v227 = vpop.f32.mrb[0].mxu0
  %v228 = vadd.f32 0.0, %v227
  %v229 = vpop.f32.mrb[0].mxu0
  %230 = vmatprep.mubr.bf16.mxu0 0
  %231 = vmatmul.mubr.bf16.gmra.mrb[0].mxu0 %v64
  %v232 = vpop.f32.mrb[0].mxu0
  %v233 = vadd.f32 0.0, %v232
  %v234 = vpop.f32.mrb[0].mxu0
  %v235 = vpop.f32.mrb[0].mxu0
  %v236 = vadd.f32 0.0, %v235
  %v237 = vpop.f32.mrb[0].mxu0
  %238 = vmatprep.mubr.bf16.mxu0 0
  %239 = vmatmul.mubr.bf16.gmra.mrb[0].mxu0 %v65
  %v240 = vpop.f32.mrb[0].mxu0
  %v241 = vadd.f32 0.0, %v240
  %v242 = vpop.f32.mrb[0].mxu0
  %v243 = vpop.f32.mrb[0].mxu0
  %v244 = vadd.f32 0.0, %v243
  %v245 = vpop.f32.mrb[0].mxu0
  %246 = vdwg.mxu0
  %v247 = vadd.f32 %v66, %v185
  %v248 = vadd.f32 %v67, %v188
  %v249 = vadd.f32 %v68, %v193
  %v250 = vadd.f32 %v69, %v196
  %v251 = vadd.f32 %v70, %v201
  %v252 = vadd.f32 %v71, %v204
  %v253 = vadd.f32 %v72, %v209
  %v254 = vadd.f32 %v73, %v212
  %v255 = vadd.f32 %v74, %v217
  %v256 = vadd.f32 %v75, %v220
  %v257 = vadd.f32 %v76, %v225
  %v258 = vadd.f32 %v77, %v228
  %v259 = vadd.f32 %v78, %v233
  %v260 = vadd.f32 %v79, %v236
  %v261 = vadd.f32 %v80, %v241
  %v262 = vadd.f32 %v81, %v244
  %263 = vst [vmem:[#allocation2] sm:$0xff] %v247
  %264 = vst [vmem:[#allocation2 + $0x8] sm:$0xff] %v248
  %265 = vst [vmem:[#allocation2 + $0x10] sm:$0xff] %v249
  %266 = vst [vmem:[#allocation2 + $0x18] sm:$0xff] %v250
  %267 = vst [vmem:[#allocation2 + $0x20] sm:$0xff] %v251
  %268 = vst [vmem:[#allocation2 + $0x28] sm:$0xff] %v252
  %269 = vst [vmem:[#allocation2 + $0x30] sm:$0xff] %v253
  %270 = vst [vmem:[#allocation2 + $0x38] sm:$0xff] %v254
  %271 = vst [vmem:[#allocation2 + $0x40] sm:$0xff] %v255
  %272 = vst [vmem:[#allocation2 + $0x48] sm:$0xff] %v256
  %273 = vst [vmem:[#allocation2 + $0x50] sm:$0xff] %v257
  %274 = vst [vmem:[#allocation2 + $0x58] sm:$0xff] %v258
  %275 = vst [vmem:[#allocation2 + $0x60] sm:$0xff] %v259
  %276 = vst [vmem:[#allocation2 + $0x68] sm:$0xff] %v260
  %277 = vst [vmem:[#allocation2 + $0x70] sm:$0xff] %v261
  %278 = vst [vmem:[#allocation2 + $0x78] sm:$0xff] %v262
  // Predicated region
  $region42: #{encoder_forward.2} parent=0 // pred_check
    %p279 = pneg %p33
  $region43: #{encoder_forward.2} parent=0 // pred_check_branch
    %281 = sbr.rel (%p279) target = $region45
  $region44: #{encoder_forward.2} parent=0 // pred_region
    %v282 = vld [vmem:[%s2] sm:$0xf]
    %v283 = vld [vmem:[%s2 + $0x4] sm:$0xf]
    %v284 = vld [vmem:[%s2 + $0x8] sm:$0xf]
    %v285 = vld [vmem:[%s2 + $0xc] sm:$0xf]
    %v286 = vld [vmem:[%s2 + $0x10] sm:$0xf]
    %v287 = vld [vmem:[%s2 + $0x14] sm:$0xf]
    %v288 = vld [vmem:[%s2 + $0x18] sm:$0xf]
    %v289 = vld [vmem:[%s2 + $0x1c] sm:$0xf]
    %v290 = vld [vmem:[%s2 + $0x20] sm:$0xf]
    %v291 = vld [vmem:[%s2 + $0x24] sm:$0xf]
    %v292 = vld [vmem:[%s2 + $0x28] sm:$0xf]
    %v293 = vld [vmem:[%s2 + $0x2c] sm:$0xf]
    %v294 = vld [vmem:[%s2 + $0x30] sm:$0xf]
    %v295 = vld [vmem:[%s2 + $0x34] sm:$0xf]
    %v296 = vld [vmem:[%s2 + $0x38] sm:$0xf]
    %v297 = vld [vmem:[%s2 + $0x3c] sm:$0xf]
    %v298 = vld [vmem:[#allocation2] sm:$0xff]
    %v299 = vld [vmem:[#allocation2 + $0x8] sm:$0xff]
    %v300 = vld [vmem:[#allocation2 + $0x10] sm:$0xff]
    %v301 = vld [vmem:[#allocation2 + $0x18] sm:$0xff]
    %v302 = vld [vmem:[#allocation2 + $0x20] sm:$0xff]
    %v303 = vld [vmem:[#allocation2 + $0x28] sm:$0xff]
    %v304 = vld [vmem:[#allocation2 + $0x30] sm:$0xff]
    %v305 = vld [vmem:[#allocation2 + $0x38] sm:$0xff]
    %v306 = vld [vmem:[#allocation2 + $0x40] sm:$0xff]
    %v307 = vld [vmem:[#allocation2 + $0x48] sm:$0xff]
    %v308 = vld [vmem:[#allocation2 + $0x50] sm:$0xff]
    %v309 = vld [vmem:[#allocation2 + $0x58] sm:$0xff]
    %v310 = vld [vmem:[#allocation2 + $0x60] sm:$0xff]
    %v311 = vld [vmem:[#allocation2 + $0x68] sm:$0xff]
    %v312 = vld [vmem:[#allocation2 + $0x70] sm:$0xff]
    %v313 = vld [vmem:[#allocation2 + $0x78] sm:$0xff]
    %v314 = vld [vmem:[%s3] sm:$0xff]
    %v315 = vld [vmem:[%s3 + $0x8] sm:$0xff]
    %v316 = vld [vmem:[%s3 + $0x10] sm:$0xff]
    %v317 = vld [vmem:[%s3 + $0x18] sm:$0xff]
    %v318 = vld [vmem:[%s3 + $0x20] sm:$0xff]
    %v319 = vld [vmem:[%s3 + $0x28] sm:$0xff]
    %v320 = vld [vmem:[%s3 + $0x30] sm:$0xff]
    %v321 = vld [vmem:[%s3 + $0x38] sm:$0xff]
    %v322 = vld [vmem:[%s3 + $0x40] sm:$0xff]
    %v323 = vld [vmem:[%s3 + $0x48] sm:$0xff]
    %v324 = vld [vmem:[%s3 + $0x50] sm:$0xff]
    %v325 = vld [vmem:[%s3 + $0x58] sm:$0xff]
    %v326 = vld [vmem:[%s3 + $0x60] sm:$0xff]
    %v327 = vld [vmem:[%s3 + $0x68] sm:$0xff]
    %v328 = vld [vmem:[%s3 + $0x70] sm:$0xff]
    %v329 = vld [vmem:[%s3 + $0x78] sm:$0xff]
    %331 = vset.pattern.permute.xlu0 0
    %332 = vperm.xlu0 %331, %v314
    %v333 = vpop.permute.xlu0 %332
    %336 = vset.pattern.permute.xlu0 0
    %337 = vperm.xlu0 %336, %v315
    %v338 = vpop.permute.xlu0 %337
    %341 = vset.pattern.permute.xlu0 0
    %342 = vperm.xlu0 %341, %v316
    %v343 = vpop.permute.xlu0 %342
    %346 = vset.pattern.permute.xlu0 0
    %347 = vperm.xlu0 %346, %v317
    %v348 = vpop.permute.xlu0 %347
    %351 = vset.pattern.permute.xlu0 0
    %352 = vperm.xlu0 %351, %v318
    %v353 = vpop.permute.xlu0 %352
    %356 = vset.pattern.permute.xlu0 0
    %357 = vperm.xlu0 %356, %v319
    %v358 = vpop.permute.xlu0 %357
    %361 = vset.pattern.permute.xlu0 0
    %362 = vperm.xlu0 %361, %v320
    %v363 = vpop.permute.xlu0 %362
    %366 = vset.pattern.permute.xlu0 0
    %367 = vperm.xlu0 %366, %v321
    %v368 = vpop.permute.xlu0 %367
    %371 = vset.pattern.permute.xlu0 0
    %372 = vperm.xlu0 %371, %v322
    %v373 = vpop.permute.xlu0 %372
    %376 = vset.pattern.permute.xlu0 0
    %377 = vperm.xlu0 %376, %v323
    %v378 = vpop.permute.xlu0 %377
    %381 = vset.pattern.permute.xlu0 0
    %382 = vperm.xlu0 %381, %v324
    %v383 = vpop.permute.xlu0 %382
    %386 = vset.pattern.permute.xlu0 0
    %387 = vperm.xlu0 %386, %v325
    %v388 = vpop.permute.xlu0 %387
    %391 = vset.pattern.permute.xlu0 0
    %392 = vperm.xlu0 %391, %v326
    %v393 = vpop.permute.xlu0 %392
    %396 = vset.pattern.permute.xlu0 0
    %397 = vperm.xlu0 %396, %v327
    %v398 = vpop.permute.xlu0 %397
    %401 = vset.pattern.permute.xlu0 0
    %402 = vperm.xlu0 %401, %v328
    %v403 = vpop.permute.xlu0 %402
    %406 = vset.pattern.permute.xlu0 0
    %407 = vperm.xlu0 %406, %v329
    %v408 = vpop.permute.xlu0 %407
    %v410 = vmul.f32 %v298, %v333
    %v411 = vmul.f32 %v299, %v338
    %v412 = vmul.f32 %v300, %v343
    %v413 = vmul.f32 %v301, %v348
    %v414 = vmul.f32 %v302, %v353
    %v415 = vmul.f32 %v303, %v358
    %v416 = vmul.f32 %v304, %v363
    %v417 = vmul.f32 %v305, %v368
    %v418 = vmul.f32 %v306, %v373
    %v419 = vmul.f32 %v307, %v378
    %v420 = vmul.f32 %v308, %v383
    %v421 = vmul.f32 %v309, %v388
    %v422 = vmul.f32 %v310, %v393
    %v423 = vmul.f32 %v311, %v398
    %v424 = vmul.f32 %v312, %v403
    %v425 = vmul.f32 %v313, %v408
    %v426 = vld [vmem:[%s4] sm:$0xff]
    %v427 = vld [vmem:[%s4 + $0x8] sm:$0xff]
    %v428 = vld [vmem:[%s4 + $0x10] sm:$0xff]
    %v429 = vld [vmem:[%s4 + $0x18] sm:$0xff]
    %v430 = vld [vmem:[%s4 + $0x20] sm:$0xff]
    %v431 = vld [vmem:[%s4 + $0x28] sm:$0xff]
    %v432 = vld [vmem:[%s4 + $0x30] sm:$0xff]
    %v433 = vld [vmem:[%s4 + $0x38] sm:$0xff]
    %v434 = vld [vmem:[%s4 + $0x40] sm:$0xff]
    %v435 = vld [vmem:[%s4 + $0x48] sm:$0xff]
    %v436 = vld [vmem:[%s4 + $0x50] sm:$0xff]
    %v437 = vld [vmem:[%s4 + $0x58] sm:$0xff]
    %v438 = vld [vmem:[%s4 + $0x60] sm:$0xff]
    %v439 = vld [vmem:[%s4 + $0x68] sm:$0xff]
    %v440 = vld [vmem:[%s4 + $0x70] sm:$0xff]
    %v441 = vld [vmem:[%s4 + $0x78] sm:$0xff]
    %v442 = vunpack.c.l.bf16 %v282
    %v443 = vunpack.c.l.bf16 %v283
    %v444 = vunpack.c.l.bf16 %v284
    %v445 = vunpack.c.l.bf16 %v285
    %v446 = vunpack.c.l.bf16 %v286
    %v447 = vunpack.c.l.bf16 %v287
    %v448 = vunpack.c.l.bf16 %v288
    %v449 = vunpack.c.l.bf16 %v289
    %v450 = vunpack.c.l.bf16 %v290
    %v451 = vunpack.c.l.bf16 %v291
    %v452 = vunpack.c.l.bf16 %v292
    %v453 = vunpack.c.l.bf16 %v293
    %v454 = vunpack.c.l.bf16 %v294
    %v455 = vunpack.c.l.bf16 %v295
    %v456 = vunpack.c.l.bf16 %v296
    %v457 = vunpack.c.l.bf16 %v297
    %459 = vset.pattern.permute.xlu0 0
    %460 = vperm.xlu0 %459, %v426
    %v461 = vpop.permute.xlu0 %460
    %464 = vset.pattern.permute.xlu0 0
    %465 = vperm.xlu0 %464, %v427
    %v466 = vpop.permute.xlu0 %465
    %469 = vset.pattern.permute.xlu0 0
    %470 = vperm.xlu0 %469, %v428
    %v471 = vpop.permute.xlu0 %470
    %474 = vset.pattern.permute.xlu0 0
    %475 = vperm.xlu0 %474, %v429
    %v476 = vpop.permute.xlu0 %475
    %479 = vset.pattern.permute.xlu0 0
    %480 = vperm.xlu0 %479, %v430
    %v481 = vpop.permute.xlu0 %480
    %484 = vset.pattern.permute.xlu0 0
    %485 = vperm.xlu0 %484, %v431
    %v486 = vpop.permute.xlu0 %485
    %489 = vset.pattern.permute.xlu0 0
    %490 = vperm.xlu0 %489, %v432
    %v491 = vpop.permute.xlu0 %490
    %494 = vset.pattern.permute.xlu0 0
    %495 = vperm.xlu0 %494, %v433
    %v496 = vpop.permute.xlu0 %495
    %499 = vset.pattern.permute.xlu0 0
    %500 = vperm.xlu0 %499, %v434
    %v501 = vpop.permute.xlu0 %500
    %504 = vset.pattern.permute.xlu0 0
    %505 = vperm.xlu0 %504, %v435
    %v506 = vpop.permute.xlu0 %505
    %509 = vset.pattern.permute.xlu0 0
    %510 = vperm.xlu0 %509, %v436
    %v511 = vpop.permute.xlu0 %510
    %514 = vset.pattern.permute.xlu0 0
    %515 = vperm.xlu0 %514, %v437
    %v516 = vpop.permute.xlu0 %515
    %519 = vset.pattern.permute.xlu0 0
    %520 = vperm.xlu0 %519, %v438
    %v521 = vpop.permute.xlu0 %520
    %524 = vset.pattern.permute.xlu0 0
    %525 = vperm.xlu0 %524, %v439
    %v526 = vpop.permute.xlu0 %525
    %529 = vset.pattern.permute.xlu0 0
    %530 = vperm.xlu0 %529, %v440
    %v531 = vpop.permute.xlu0 %530
    %534 = vset.pattern.permute.xlu0 0
    %535 = vperm.xlu0 %534, %v441
    %v536 = vpop.permute.xlu0 %535
    %v538 = vmul.f32 %v461, %v442
    %v539 = vmul.f32 %v466, %v443
    %v540 = vmul.f32 %v471, %v444
    %v541 = vmul.f32 %v476, %v445
    %v542 = vmul.f32 %v481, %v446
    %v543 = vmul.f32 %v486, %v447
    %v544 = vmul.f32 %v491, %v448
    %v545 = vmul.f32 %v496, %v449
    %v546 = vmul.f32 %v501, %v450
    %v547 = vmul.f32 %v506, %v451
    %v548 = vmul.f32 %v511, %v452
    %v549 = vmul.f32 %v516, %v453
    %v550 = vmul.f32 %v521, %v454
    %v551 = vmul.f32 %v526, %v455
    %v552 = vmul.f32 %v531, %v456
    %v553 = vmul.f32 %v536, %v457
    %v554 = vadd.f32 %v410, %v538
    %v555 = vadd.f32 %v411, %v539
    %v556 = vadd.f32 %v412, %v540
    %v557 = vadd.f32 %v413, %v541
    %v558 = vadd.f32 %v414, %v542
    %v559 = vadd.f32 %v415, %v543
    %v560 = vadd.f32 %v416, %v544
    %v561 = vadd.f32 %v417, %v545
    %v562 = vadd.f32 %v418, %v546
    %v563 = vadd.f32 %v419, %v547
    %v564 = vadd.f32 %v420, %v548
    %v565 = vadd.f32 %v421, %v549
    %v566 = vadd.f32 %v422, %v550
    %v567 = vadd.f32 %v423, %v551
    %v568 = vadd.f32 %v424, %v552
    %v569 = vadd.f32 %v425, %v553
    %v570 = vld [vmem:[%s5] sm:$0xf]
    %v571 = vld [vmem:[%s5 + $0x4] sm:$0xf]
    %v572 = vld [vmem:[%s5 + $0x8] sm:$0xf]
    %v573 = vld [vmem:[%s5 + $0xc] sm:$0xf]
    %v574 = vld [vmem:[%s5 + $0x10] sm:$0xf]
    %v575 = vld [vmem:[%s5 + $0x14] sm:$0xf]
    %v576 = vld [vmem:[%s5 + $0x18] sm:$0xf]
    %v577 = vld [vmem:[%s5 + $0x1c] sm:$0xf]
    %v578 = vld [vmem:[%s5 + $0x20] sm:$0xf]
    %v579 = vld [vmem:[%s5 + $0x24] sm:$0xf]
    %v580 = vld [vmem:[%s5 + $0x28] sm:$0xf]
    %v581 = vld [vmem:[%s5 + $0x2c] sm:$0xf]
    %v582 = vld [vmem:[%s5 + $0x30] sm:$0xf]
    %v583 = vld [vmem:[%s5 + $0x34] sm:$0xf]
    %v584 = vld [vmem:[%s5 + $0x38] sm:$0xf]
    %v585 = vld [vmem:[%s5 + $0x3c] sm:$0xf]
    %v586 = vpack.c.bf16 %v555, %v554
    %v587 = vpack.c.bf16 %v557, %v556
    %v588 = vpack.c.bf16 %v559, %v558
    %v589 = vpack.c.bf16 %v561, %v560
    %v590 = vpack.c.bf16 %v563, %v562
    %v591 = vpack.c.bf16 %v565, %v564
    %v592 = vpack.c.bf16 %v567, %v566
    %v593 = vpack.c.bf16 %v569, %v568
    %v594 = vld [vmem:[%s6] sm:$0xf]
    %v595 = vld [vmem:[%s6 + $0x4] sm:$0xf]
    %v596 = vld [vmem:[%s6 + $0x8] sm:$0xf]
    %v597 = vld [vmem:[%s6 + $0xc] sm:$0xf]
    %v598 = vld [vmem:[%s6 + $0x10] sm:$0xf]
    %v599 = vld [vmem:[%s6 + $0x14] sm:$0xf]
    %v600 = vld [vmem:[%s6 + $0x18] sm:$0xf]
    %v601 = vld [vmem:[%s6 + $0x1c] sm:$0xf]
    %v602 = vld [vmem:[%s6 + $0x20] sm:$0xf]
    %v603 = vld [vmem:[%s6 + $0x24] sm:$0xf]
    %v604 = vld [vmem:[%s6 + $0x28] sm:$0xf]
    %v605 = vld [vmem:[%s6 + $0x2c] sm:$0xf]
    %v606 = vld [vmem:[%s6 + $0x30] sm:$0xf]
    %v607 = vld [vmem:[%s6 + $0x34] sm:$0xf]
    %v608 = vld [vmem:[%s6 + $0x38] sm:$0xf]
    %v609 = vld [vmem:[%s6 + $0x3c] sm:$0xf]
    %v626 = vunpack.c.l.b16 %v594
    %v627 = vunpack.c.l.b16 %v595
    %v628 = vunpack.c.l.b16 %v596
    %v629 = vunpack.c.l.b16 %v597
    %v630 = vunpack.c.l.b16 %v598
    %v631 = vunpack.c.l.b16 %v599
    %v632 = vunpack.c.l.b16 %v600
    %v633 = vunpack.c.l.b16 %v601
    %v634 = vunpack.c.l.b16 %v602
    %v635 = vunpack.c.l.b16 %v603
    %v636 = vunpack.c.l.b16 %v604
    %v637 = vunpack.c.l.b16 %v605
    %v638 = vunpack.c.l.b16 %v606
    %v639 = vunpack.c.l.b16 %v607
    %v640 = vunpack.c.l.b16 %v608
    %v641 = vunpack.c.l.b16 %v609
    %v642 = vpack.c.b16 %v627, %v626
    %v643 = vpack.c.b16 %v629, %v628
    %v644 = vpack.c.b16 %v631, %v630
    %v645 = vpack.c.b16 %v633, %v632
    %v646 = vpack.c.b16 %v635, %v634
    %v647 = vpack.c.b16 %v637, %v636
    %v648 = vpack.c.b16 %v639, %v638
    %v649 = vpack.c.b16 %v641, %v640
    %658 = vmatprep.subr.bf16.mxu0 0
    %659 = vmatpush1.bf16.msra.mxu0 %v642
    %660 = vmatprep.subr.bf16.mxu0 0
    %661 = vmatpush1.bf16.msra.mxu0 %v643
    %662 = vmatprep.subr.bf16.mxu0 0
    %663 = vmatpush1.bf16.msra.mxu0 %v644
    %664 = vmatprep.subr.bf16.mxu0 0
    %665 = vmatpush1.bf16.msra.mxu0 %v645
    %666 = vmatprep.subr.bf16.mxu0 0
    %667 = vmatpush1.bf16.msra.mxu0 %v646
    %668 = vmatprep.subr.bf16.mxu0 0
    %669 = vmatpush1.bf16.msra.mxu0 %v647
    %670 = vmatprep.subr.bf16.mxu0 0
    %671 = vmatpush1.bf16.msra.mxu0 %v648
    %672 = vmatprep.subr.bf16.mxu0 0
    %673 = vmatpush1.bf16.msra.mxu0 %v649
    %674 = vmatprep.subr.bf16.mxu0 0
    %675 = vmatpush1.bf16.msra.mxu0 0
    %676 = vmatprep.subr.bf16.mxu0 0
    %677 = vmatpush1.bf16.msra.mxu0 0
    %678 = vmatprep.subr.bf16.mxu0 0
    %679 = vmatpush1.bf16.msra.mxu0 0
    %680 = vmatprep.subr.bf16.mxu0 0
    %681 = vmatpush1.bf16.msra.mxu0 0
    %682 = vmatprep.subr.bf16.mxu0 0
    %683 = vmatpush1.bf16.msra.mxu0 0
    %684 = vmatprep.subr.bf16.mxu0 0
    %685 = vmatpush1.bf16.msra.mxu0 0
    %686 = vmatprep.subr.bf16.mxu0 0
    %687 = vmatpush1.bf16.msra.mxu0 0
    %688 = vmatprep.subr.bf16.mxu0 0
    %689 = vmatpush1.bf16.msra.mxu0 0
    %690 = vmatprep.mubr.bf16.mxu0 0
    %691 = vmatmul.mubr.bf16.gmra.mrb[0].mxu0 %v586
    %v692 = vpop.f32.mrb[0].mxu0
    %v693 = vadd.f32 0.0, %v692
    %v694 = vpop.f32.mrb[0].mxu0
    %v695 = vpop.f32.mrb[0].mxu0
    %v696 = vadd.f32 0.0, %v695
    %v697 = vpop.f32.mrb[0].mxu0
    %698 = vmatprep.mubr.bf16.mxu0 0
    %699 = vmatmul.mubr.bf16.gmra.mrb[0].mxu0 %v587
    %v700 = vpop.f32.mrb[0].mxu0
    %v701 = vadd.f32 0.0, %v700
    %v702 = vpop.f32.mrb[0].mxu0
    %v703 = vpop.f32.mrb[0].mxu0
    %v704 = vadd.f32 0.0, %v703
    %v705 = vpop.f32.mrb[0].mxu0
    %706 = vmatprep.mubr.bf16.mxu0 0
    %707 = vmatmul.mubr.bf16.gmra.mrb[0].mxu0 %v588
    %v708 = vpop.f32.mrb[0].mxu0
    %v709 = vadd.f32 0.0, %v708
    %v710 = vpop.f32.mrb[0].mxu0
    %v711 = vpop.f32.mrb[0].mxu0
    %v712 = vadd.f32 0.0, %v711
    %v713 = vpop.f32.mrb[0].mxu0
    %714 = vmatprep.mubr.bf16.mxu0 0
    %715 = vmatmul.mubr.bf16.gmra.mrb[0].mxu0 %v589
    %v716 = vpop.f32.mrb[0].mxu0
    %v717 = vadd.f32 0.0, %v716
    %v718 = vpop.f32.mrb[0].mxu0
    %v719 = vpop.f32.mrb[0].mxu0
    %v720 = vadd.f32 0.0, %v719
    %v721 = vpop.f32.mrb[0].mxu0
    %722 = vmatprep.mubr.bf16.mxu0 0
    %723 = vmatmul.mubr.bf16.gmra.mrb[0].mxu0 %v590
    %v724 = vpop.f32.mrb[0].mxu0
    %v725 = vadd.f32 0.0, %v724
    %v726 = vpop.f32.mrb[0].mxu0
    %v727 = vpop.f32.mrb[0].mxu0
    %v728 = vadd.f32 0.0, %v727
    %v729 = vpop.f32.mrb[0].mxu0
    %730 = vmatprep.mubr.bf16.mxu0 0
    %731 = vmatmul.mubr.bf16.gmra.mrb[0].mxu0 %v591
    %v732 = vpop.f32.mrb[0].mxu0
    %v733 = vadd.f32 0.0, %v732
    %v734 = vpop.f32.mrb[0].mxu0
    %v735 = vpop.f32.mrb[0].mxu0
    %v736 = vadd.f32 0.0, %v735
    %v737 = vpop.f32.mrb[0].mxu0
    %738 = vmatprep.mubr.bf16.mxu0 0
    %739 = vmatmul.mubr.bf16.gmra.mrb[0].mxu0 %v592
    %v740 = vpop.f32.mrb[0].mxu0
    %v741 = vadd.f32 0.0, %v740
    %v742 = vpop.f32.mrb[0].mxu0
    %v743 = vpop.f32.mrb[0].mxu0
    %v744 = vadd.f32 0.0, %v743
    %v745 = vpop.f32.mrb[0].mxu0
    %746 = vmatprep.mubr.bf16.mxu0 0
    %747 = vmatmul.mubr.bf16.gmra.mrb[0].mxu0 %v593
    %v748 = vpop.f32.mrb[0].mxu0
    %v749 = vadd.f32 0.0, %v748
    %v750 = vpop.f32.mrb[0].mxu0
    %v751 = vpop.f32.mrb[0].mxu0
    %v752 = vadd.f32 0.0, %v751
    %v753 = vpop.f32.mrb[0].mxu0
    %754 = vdwg.mxu0
    %v771 = vunpack.c.l.b16 %v282
    %v772 = vunpack.c.l.b16 %v283
    %v773 = vunpack.c.l.b16 %v284
    %v774 = vunpack.c.l.b16 %v285
    %v775 = vunpack.c.l.b16 %v286
    %v776 = vunpack.c.l.b16 %v287
    %v777 = vunpack.c.l.b16 %v288
    %v778 = vunpack.c.l.b16 %v289
    %v779 = vunpack.c.l.b16 %v290
    %v780 = vunpack.c.l.b16 %v291
    %v781 = vunpack.c.l.b16 %v292
    %v782 = vunpack.c.l.b16 %v293
    %v783 = vunpack.c.l.b16 %v294
    %v784 = vunpack.c.l.b16 %v295
    %v785 = vunpack.c.l.b16 %v296
    %v786 = vunpack.c.l.b16 %v297
    %v787 = vpack.c.b16 %v772, %v771
    %v788 = vpack.c.b16 %v774, %v773
    %v789 = vpack.c.b16 %v776, %v775
    %v790 = vpack.c.b16 %v778, %v777
    %v791 = vpack.c.b16 %v780, %v779
    %v792 = vpack.c.b16 %v782, %v781
    %v793 = vpack.c.b16 %v784, %v783
    %v794 = vpack.c.b16 %v786, %v785
    %v819 = vunpack.c.l.b16 %v570
    %v820 = vunpack.c.l.b16 %v571
    %v821 = vunpack.c.l.b16 %v572
    %v822 = vunpack.c.l.b16 %v573
    %v823 = vunpack.c.l.b16 %v574
    %v824 = vunpack.c.l.b16 %v575
    %v825 = vunpack.c.l.b16 %v576
    %v826 = vunpack.c.l.b16 %v577
    %v827 = vunpack.c.l.b16 %v578
    %v828 = vunpack.c.l.b16 %v579
    %v829 = vunpack.c.l.b16 %v580
    %v830 = vunpack.c.l.b16 %v581
    %v831 = vunpack.c.l.b16 %v582
    %v832 = vunpack.c.l.b16 %v583
    %v833 = vunpack.c.l.b16 %v584
    %v834 = vunpack.c.l.b16 %v585
    %v835 = vpack.c.b16 %v820, %v819
    %v836 = vpack.c.b16 %v822, %v821
    %v837 = vpack.c.b16 %v824, %v823
    %v838 = vpack.c.b16 %v826, %v825
    %v839 = vpack.c.b16 %v828, %v827
    %v840 = vpack.c.b16 %v830, %v829
    %v841 = vpack.c.b16 %v832, %v831
    %v842 = vpack.c.b16 %v834, %v833
    %851 = vmatprep.subr.bf16.mxu0 0
    %852 = vmatpush1.bf16.msra.mxu0 %v835
    %853 = vmatprep.subr.bf16.mxu0 0
    %854 = vmatpush1.bf16.msra.mxu0 %v836
    %855 = vmatprep.subr.bf16.mxu0 0
    %856 = vmatpush1.bf16.msra.mxu0 %v837
    %857 = vmatprep.subr.bf16.mxu0 0
    %858 = vmatpush1.bf16.msra.mxu0 %v838
    %859 = vmatprep.subr.bf16.mxu0 0
    %860 = vmatpush1.bf16.msra.mxu0 %v839
    %861 = vmatprep.subr.bf16.mxu0 0
    %862 = vmatpush1.bf16.msra.mxu0 %v840
    %863 = vmatprep.subr.bf16.mxu0 0
    %864 = vmatpush1.bf16.msra.mxu0 %v841
    %865 = vmatprep.subr.bf16.mxu0 0
    %866 = vmatpush1.bf16.msra.mxu0 %v842
    %867 = vmatprep.subr.bf16.mxu0 0
    %868 = vmatpush1.bf16.msra.mxu0 0
    %869 = vmatprep.subr.bf16.mxu0 0
    %870 = vmatpush1.bf16.msra.mxu0 0
    %871 = vmatprep.subr.bf16.mxu0 0
    %872 = vmatpush1.bf16.msra.mxu0 0
    %873 = vmatprep.subr.bf16.mxu0 0
    %874 = vmatpush1.bf16.msra.mxu0 0
    %875 = vmatprep.subr.bf16.mxu0 0
    %876 = vmatpush1.bf16.msra.mxu0 0
    %877 = vmatprep.subr.bf16.mxu0 0
    %878 = vmatpush1.bf16.msra.mxu0 0
    %879 = vmatprep.subr.bf16.mxu0 0
    %880 = vmatpush1.bf16.msra.mxu0 0
    %881 = vmatprep.subr.bf16.mxu0 0
    %882 = vmatpush1.bf16.msra.mxu0 0
    %883 = vmatprep.mubr.bf16.mxu0 0
    %884 = vmatmul.mubr.bf16.gmra.mrb[0].mxu0 %v787
    %v885 = vpop.f32.mrb[0].mxu0
    %v886 = vadd.f32 %v693, %v885
    %v887 = vpop.f32.mrb[0].mxu0
    %v888 = vpop.f32.mrb[0].mxu0
    %v889 = vadd.f32 %v696, %v888
    %v890 = vpop.f32.mrb[0].mxu0
    %891 = vmatprep.mubr.bf16.mxu0 0
    %892 = vmatmul.mubr.bf16.gmra.mrb[0].mxu0 %v788
    %v893 = vpop.f32.mrb[0].mxu0
    %v894 = vadd.f32 %v701, %v893
    %v895 = vpop.f32.mrb[0].mxu0
    %v896 = vpop.f32.mrb[0].mxu0
    %v897 = vadd.f32 %v704, %v896
    %v898 = vpop.f32.mrb[0].mxu0
    %899 = vmatprep.mubr.bf16.mxu0 0
    %900 = vmatmul.mubr.bf16.gmra.mrb[0].mxu0 %v789
    %v901 = vpop.f32.mrb[0].mxu0
    %v902 = vadd.f32 %v709, %v901
    %v903 = vpop.f32.mrb[0].mxu0
    %v904 = vpop.f32.mrb[0].mxu0
    %v905 = vadd.f32 %v712, %v904
    %v906 = vpop.f32.mrb[0].mxu0
    %907 = vmatprep.mubr.bf16.mxu0 0
    %908 = vmatmul.mubr.bf16.gmra.mrb[0].mxu0 %v790
    %v909 = vpop.f32.mrb[0].mxu0
    %v910 = vadd.f32 %v717, %v909
    %v911 = vpop.f32.mrb[0].mxu0
    %v912 = vpop.f32.mrb[0].mxu0
    %v913 = vadd.f32 %v720, %v912
    %v914 = vpop.f32.mrb[0].mxu0
    %915 = vmatprep.mubr.bf16.mxu0 0
    %916 = vmatmul.mubr.bf16.gmra.mrb[0].mxu0 %v791
    %v917 = vpop.f32.mrb[0].mxu0
    %v918 = vadd.f32 %v725, %v917
    %v919 = vpop.f32.mrb[0].mxu0
    %v920 = vpop.f32.mrb[0].mxu0
    %v921 = vadd.f32 %v728, %v920
    %v922 = vpop.f32.mrb[0].mxu0
    %923 = vmatprep.mubr.bf16.mxu0 0
    %924 = vmatmul.mubr.bf16.gmra.mrb[0].mxu0 %v792
    %v925 = vpop.f32.mrb[0].mxu0
    %v926 = vadd.f32 %v733, %v925
    %v927 = vpop.f32.mrb[0].mxu0
    %v928 = vpop.f32.mrb[0].mxu0
    %v929 = vadd.f32 %v736, %v928
    %v930 = vpop.f32.mrb[0].mxu0
    %931 = vmatprep.mubr.bf16.mxu0 0
    %932 = vmatmul.mubr.bf16.gmra.mrb[0].mxu0 %v793
    %v933 = vpop.f32.mrb[0].mxu0
    %v934 = vadd.f32 %v741, %v933
    %v935 = vpop.f32.mrb[0].mxu0
    %v936 = vpop.f32.mrb[0].mxu0
    %v937 = vadd.f32 %v744, %v936
    %v938 = vpop.f32.mrb[0].mxu0
    %939 = vmatprep.mubr.bf16.mxu0 0
    %940 = vmatmul.mubr.bf16.gmra.mrb[0].mxu0 %v794
    %v941 = vpop.f32.mrb[0].mxu0
    %v942 = vadd.f32 %v749, %v941
    %v943 = vpop.f32.mrb[0].mxu0
    %v944 = vpop.f32.mrb[0].mxu0
    %v945 = vadd.f32 %v752, %v944
    %v946 = vpop.f32.mrb[0].mxu0
    %947 = vdwg.mxu0
    %v948 = vld [vmem:[%s7] sm:$0x1]
    %v950 = vlaneseq
    %v951 = vshrl.u32 %v950, 7
    %v952 = vsub.s32 0, %v951
    %v953 = vrot.slane %v948, %v952
    %v955 = vadd.f32 %v886, %v953
    %v956 = vadd.f32 %v889, %v953
    %v957 = vadd.f32 %v894, %v953
    %v958 = vadd.f32 %v897, %v953
    %v959 = vadd.f32 %v902, %v953
    %v960 = vadd.f32 %v905, %v953
    %v961 = vadd.f32 %v910, %v953
    %v962 = vadd.f32 %v913, %v953
    %v963 = vadd.f32 %v918, %v953
    %v964 = vadd.f32 %v921, %v953
    %v965 = vadd.f32 %v926, %v953
    %v966 = vadd.f32 %v929, %v953
    %v967 = vadd.f32 %v934, %v953
    %v968 = vadd.f32 %v937, %v953
    %v969 = vadd.f32 %v942, %v953
    %v970 = vadd.f32 %v945, %v953
    %v971 = vmul.f32 %v955, %v955
    %v972 = vmul.f32 %v956, %v956
    %v973 = vmul.f32 %v957, %v957
    %v974 = vmul.f32 %v958, %v958
    %v975 = vmul.f32 %v959, %v959
    %v976 = vmul.f32 %v960, %v960
    %v977 = vmul.f32 %v961, %v961
    %v978 = vmul.f32 %v962, %v962
    %v979 = vmul.f32 %v963, %v963
    %v980 = vmul.f32 %v964, %v964
    %v981 = vmul.f32 %v965, %v965
    %v982 = vmul.f32 %v966, %v966
    %v983 = vmul.f32 %v967, %v967
    %v984 = vmul.f32 %v968, %v968
    %v985 = vmul.f32 %v969, %v969
    %v986 = vmul.f32 %v970, %v970
    %987 = vadd.xlane.f32.xlu0 %v971
    %v988 = vpop.xlane.xlu0 %987
    %989 = vadd.xlane.f32.xlu0 %v972
    %v990 = vpop.xlane.xlu0 %989
    %991 = vadd.xlane.f32.xlu0 %v973
    %v992 = vpop.xlane.xlu0 %991
    %993 = vadd.xlane.f32.xlu0 %v974
    %v994 = vpop.xlane.xlu0 %993
    %995 = vadd.xlane.f32.xlu0 %v975
    %v996 = vpop.xlane.xlu0 %995
    %997 = vadd.xlane.f32.xlu0 %v976
    %v998 = vpop.xlane.xlu0 %997
    %999 = vadd.xlane.f32.xlu0 %v977
    %v1000 = vpop.xlane.xlu0 %999
    %1001 = vadd.xlane.f32.xlu0 %v978
    %v1002 = vpop.xlane.xlu0 %1001
    %1003 = vadd.xlane.f32.xlu0 %v979
    %v1004 = vpop.xlane.xlu0 %1003
    %1005 = vadd.xlane.f32.xlu0 %v980
    %v1006 = vpop.xlane.xlu0 %1005
    %1007 = vadd.xlane.f32.xlu0 %v981
    %v1008 = vpop.xlane.xlu0 %1007
    %1009 = vadd.xlane.f32.xlu0 %v982
    %v1010 = vpop.xlane.xlu0 %1009
    %1011 = vadd.xlane.f32.xlu0 %v983
    %v1012 = vpop.xlane.xlu0 %1011
    %1013 = vadd.xlane.f32.xlu0 %v984
    %v1014 = vpop.xlane.xlu0 %1013
    %1015 = vadd.xlane.f32.xlu0 %v985
    %v1016 = vpop.xlane.xlu0 %1015
    %1017 = vadd.xlane.f32.xlu0 %v986
    %v1018 = vpop.xlane.xlu0 %1017
    %v1019 = vmax.f32 %v988, 1e-24
    %v1020 = vmax.f32 %v990, 1e-24
    %v1021 = vmax.f32 %v992, 1e-24
    %v1022 = vmax.f32 %v994, 1e-24
    %v1023 = vmax.f32 %v996, 1e-24
    %v1024 = vmax.f32 %v998, 1e-24
    %v1025 = vmax.f32 %v1000, 1e-24
    %v1026 = vmax.f32 %v1002, 1e-24
    %v1027 = vmax.f32 %v1004, 1e-24
    %v1028 = vmax.f32 %v1006, 1e-24
    %v1029 = vmax.f32 %v1008, 1e-24
    %v1030 = vmax.f32 %v1010, 1e-24
    %v1031 = vmax.f32 %v1012, 1e-24
    %v1032 = vmax.f32 %v1014, 1e-24
    %v1033 = vmax.f32 %v1016, 1e-24
    %v1034 = vmax.f32 %v1018, 1e-24
    %v1035 = vrsqrt.pop %v1019
    %v1036 = vrsqrt.pop %v1020
    %v1037 = vrsqrt.pop %v1021
    %v1038 = vrsqrt.pop %v1022
    %v1039 = vrsqrt.pop %v1023
    %v1040 = vrsqrt.pop %v1024
    %v1041 = vrsqrt.pop %v1025
    %v1042 = vrsqrt.pop %v1026
    %v1043 = vrsqrt.pop %v1027
    %v1044 = vrsqrt.pop %v1028
    %v1045 = vrsqrt.pop %v1029
    %v1046 = vrsqrt.pop %v1030
    %v1047 = vrsqrt.pop %v1031
    %v1048 = vrsqrt.pop %v1032
    %v1049 = vrsqrt.pop %v1033
    %v1050 = vrsqrt.pop %v1034
    %v1051 = vmul.f32 %v955, %v1035
    %v1052 = vmul.f32 %v956, %v1036
    %v1053 = vmul.f32 %v957, %v1037
    %v1054 = vmul.f32 %v958, %v1038
    %v1055 = vmul.f32 %v959, %v1039
    %v1056 = vmul.f32 %v960, %v1040
    %v1057 = vmul.f32 %v961, %v1041
    %v1058 = vmul.f32 %v962, %v1042
    %v1059 = vmul.f32 %v963, %v1043
    %v1060 = vmul.f32 %v964, %v1044
    %v1061 = vmul.f32 %v965, %v1045
    %v1062 = vmul.f32 %v966, %v1046
    %v1063 = vmul.f32 %v967, %v1047
    %v1064 = vmul.f32 %v968, %v1048
    %v1065 = vmul.f32 %v969, %v1049
    %v1066 = vmul.f32 %v970, %v1050
    %vm1067 = vcmp.ge.f32.partialorder %v1051, 0.0
    %vm1068 = vcmp.ge.f32.partialorder %v1052, 0.0
    %vm1069 = vcmp.ge.f32.partialorder %v1053, 0.0
    %vm1070 = vcmp.ge.f32.partialorder %v1054, 0.0
    %vm1071 = vcmp.ge.f32.partialorder %v1055, 0.0
    %vm1072 = vcmp.ge.f32.partialorder %v1056, 0.0
    %vm1073 = vcmp.ge.f32.partialorder %v1057, 0.0
    %vm1074 = vcmp.ge.f32.partialorder %v1058, 0.0
    %vm1075 = vcmp.ge.f32.partialorder %v1059, 0.0
    %vm1076 = vcmp.ge.f32.partialorder %v1060, 0.0
    %vm1077 = vcmp.ge.f32.partialorder %v1061, 0.0
    %vm1078 = vcmp.ge.f32.partialorder %v1062, 0.0
    %vm1079 = vcmp.ge.f32.partialorder %v1063, 0.0
    %vm1080 = vcmp.ge.f32.partialorder %v1064, 0.0
    %vm1081 = vcmp.ge.f32.partialorder %v1065, 0.0
    %vm1082 = vcmp.ge.f32.partialorder %v1066, 0.0
    %v1083 = vld [vmem:[%s8] sm:$0x1]
    %v1085 = vlaneseq
    %v1086 = vshrl.u32 %v1085, 7
    %v1087 = vsub.s32 0, %v1086
    %v1088 = vrot.slane %v1083, %v1087
    %v1090 = vmul.f32 %v1088, %v1051
    %v1091 = vmul.f32 %v1088, %v1052
    %v1092 = vmul.f32 %v1088, %v1053
    %v1093 = vmul.f32 %v1088, %v1054
    %v1094 = vmul.f32 %v1088, %v1055
    %v1095 = vmul.f32 %v1088, %v1056
    %v1096 = vmul.f32 %v1088, %v1057
    %v1097 = vmul.f32 %v1088, %v1058
    %v1098 = vmul.f32 %v1088, %v1059
    %v1099 = vmul.f32 %v1088, %v1060
    %v1100 = vmul.f32 %v1088, %v1061
    %v1101 = vmul.f32 %v1088, %v1062
    %v1102 = vmul.f32 %v1088, %v1063
    %v1103 = vmul.f32 %v1088, %v1064
    %v1104 = vmul.f32 %v1088, %v1065
    %v1105 = vmul.f32 %v1088, %v1066
    %v1106 = vsel %vm1067, %v1051, %v1090
    %v1107 = vsel %vm1068, %v1052, %v1091
    %v1108 = vsel %vm1069, %v1053, %v1092
    %v1109 = vsel %vm1070, %v1054, %v1093
    %v1110 = vsel %vm1071, %v1055, %v1094
    %v1111 = vsel %vm1072, %v1056, %v1095
    %v1112 = vsel %vm1073, %v1057, %v1096
    %v1113 = vsel %vm1074, %v1058, %v1097
    %v1114 = vsel %vm1075, %v1059, %v1098
    %v1115 = vsel %vm1076, %v1060, %v1099
    %v1116 = vsel %vm1077, %v1061, %v1100
    %v1117 = vsel %vm1078, %v1062, %v1101
    %v1118 = vsel %vm1079, %v1063, %v1102
    %v1119 = vsel %vm1080, %v1064, %v1103
    %v1120 = vsel %vm1081, %v1065, %v1104
    %v1121 = vsel %vm1082, %v1066, %v1105
    %v1122 = vpack.c.bf16 %v1107, %v1106
    %v1123 = vpack.c.bf16 %v1109, %v1108
    %v1124 = vpack.c.bf16 %v1111, %v1110
    %v1125 = vpack.c.bf16 %v1113, %v1112
    %v1126 = vpack.c.bf16 %v1115, %v1114
    %v1127 = vpack.c.bf16 %v1117, %v1116
    %v1128 = vpack.c.bf16 %v1119, %v1118
    %v1129 = vpack.c.bf16 %v1121, %v1120
    %v1138 = vunpack.c.l.b16 %v1122
    %v1139 = vunpack.c.h.b16 %v1122
    %v1140 = vunpack.c.l.b16 %v1123
    %v1141 = vunpack.c.h.b16 %v1123
    %v1142 = vunpack.c.l.b16 %v1124
    %v1143 = vunpack.c.h.b16 %v1124
    %v1144 = vunpack.c.l.b16 %v1125
    %v1145 = vunpack.c.h.b16 %v1125
    %v1146 = vunpack.c.l.b16 %v1126
    %v1147 = vunpack.c.h.b16 %v1126
    %v1148 = vunpack.c.l.b16 %v1127
    %v1149 = vunpack.c.h.b16 %v1127
    %v1150 = vunpack.c.l.b16 %v1128
    %v1151 = vunpack.c.h.b16 %v1128
    %v1152 = vunpack.c.l.b16 %v1129
    %v1153 = vunpack.c.h.b16 %v1129
    %v1154 = vpack.c.b16 %v1138, %v1138
    %v1155 = vpack.c.b16 %v1139, %v1139
    %v1156 = vpack.c.b16 %v1140, %v1140
    %v1157 = vpack.c.b16 %v1141, %v1141
    %v1158 = vpack.c.b16 %v1142, %v1142
    %v1159 = vpack.c.b16 %v1143, %v1143
    %v1160 = vpack.c.b16 %v1144, %v1144
    %v1161 = vpack.c.b16 %v1145, %v1145
    %v1162 = vpack.c.b16 %v1146, %v1146
    %v1163 = vpack.c.b16 %v1147, %v1147
    %v1164 = vpack.c.b16 %v1148, %v1148
    %v1165 = vpack.c.b16 %v1149, %v1149
    %v1166 = vpack.c.b16 %v1150, %v1150
    %v1167 = vpack.c.b16 %v1151, %v1151
    %v1168 = vpack.c.b16 %v1152, %v1152
    %v1169 = vpack.c.b16 %v1153, %v1153
    %1186 = vst [vmem:[%s9] sm:$0xf] %v1154
    %1187 = vst [vmem:[%s9 + $0x4] sm:$0xf] %v1155
    %1188 = vst [vmem:[%s9 + $0x8] sm:$0xf] %v1156
    %1189 = vst [vmem:[%s9 + $0xc] sm:$0xf] %v1157
    %1190 = vst [vmem:[%s9 + $0x10] sm:$0xf] %v1158
    %1191 = vst [vmem:[%s9 + $0x14] sm:$0xf] %v1159
    %1192 = vst [vmem:[%s9 + $0x18] sm:$0xf] %v1160
    %1193 = vst [vmem:[%s9 + $0x1c] sm:$0xf] %v1161
    %1194 = vst [vmem:[%s9 + $0x20] sm:$0xf] %v1162
    %1195 = vst [vmem:[%s9 + $0x24] sm:$0xf] %v1163
    %1196 = vst [vmem:[%s9 + $0x28] sm:$0xf] %v1164
    %1197 = vst [vmem:[%s9 + $0x2c] sm:$0xf] %v1165
    %1198 = vst [vmem:[%s9 + $0x30] sm:$0xf] %v1166
    %1199 = vst [vmem:[%s9 + $0x34] sm:$0xf] %v1167
    %1200 = vst [vmem:[%s9 + $0x38] sm:$0xf] %v1168
    %1201 = vst [vmem:[%s9 + $0x3c] sm:$0xf] %v1169
  $region45: #{encoder_forward.2} parent=0 // pred_fallthru
    _
  // Predicated region
  $region46: #{encoder_forward.2} parent=0 // pred_check
    _
  $region47: #{encoder_forward.2} parent=0 // pred_check_branch
    %1203 = sbr.rel (0) target = $region49
  $region48: #{encoder_forward.2} parent=0 // pred_region
    _
  $region49: #{encoder_forward.2} parent=0 // pred_fallthru
    _
  // Predicated region
  $region50: #{encoder_forward.2} parent=0 // pred_check
    _
  $region51: #{encoder_forward.2} parent=0 // pred_check_branch
    %1205 = sbr.rel (0) target = $region53
  $region52: #{encoder_forward.2} parent=0 // pred_region
    _
  $region53: #{encoder_forward.2} parent=0 // pred_fallthru
    _

</llo_original>
